<compile_context>
chip_gen: v7x
topology: tpu7x:2x2x1
jax: 0.10.0
libtpu: 0.0.40
codegen_flags: <defaults>
</compile_context>

<pallas_src>
import functools

import jax
import jax.numpy as jnp
from jax.experimental import pallas as pl
from jax.experimental.pallas import tpu as pltpu


def _silu_kernel(x_ref, o_ref, *, compute_dtype):
    x = x_ref[...].astype(compute_dtype)
    o_ref[...] = (x * jax.nn.sigmoid(x)).astype(o_ref.dtype)


# Lane-dense column candidates (all multiples of 128), widest first.
_LANE_CANDIDATES = (8192, 4096, 2048, 1024, 512, 256, 128)

# Below this size, XLA's fused elementwise already sits at roofline and the
# pallas_call fixed overhead would dominate.
_MIN_PALLAS_BYTES = 1 * 1024 * 1024


def _sublane_multiple(itemsize):
    # Packed native tiles: (8,128) for 32-bit, (16,128) for 16-bit, (32,128)
    # for 8-bit dtypes.
    if itemsize >= 4:
        return 8
    if itemsize == 2:
        return 16
    return 32


def _vmem_capacity_bytes():
    try:
        return int(pltpu.get_tpu_info().vmem_capacity_bytes)
    except Exception:
        return 64 * 1024 * 1024  # conservative: v7x per-TC physical VMEM


def _supports_native_16bit_math():
    # v6e/v7x have bf16 VPU/EUP; v5e does not. Best-effort detection; default
    # to the always-safe f32 compute path when unsure.
    try:
        info = pltpu.get_tpu_info()
        desc = " ".join(
            str(getattr(info, a, ""))
            for a in ("chip_version", "chip_name", "name", "version")
        ).lower()
        if any(tok in desc for tok in ("v6", "v7", "6e", "7x")):
            return True
    except Exception:
        pass
    return False


def silu(x, *, target_block_bytes=4 * 1024 * 1024):
    """Elementwise SiLU on an arbitrary-shaped array via a Pallas kernel."""
    orig_shape = x.shape
    dtype = x.dtype
    n = x.size
    if n == 0:
        return x

    itemsize = jnp.dtype(dtype).itemsize

    # Widest lane-dense column count (multiple of 128) dividing n so we need
    # no materialized pad / slice copies around the kernel. Elementwise op =>
    # any factorization works.
    cols = None
    for c in _LANE_CANDIDATES:
        if n % c == 0:
            cols = c
            break

    # Fallbacks: tiny inputs (launch overhead dominates) or ragged element
    # counts (pad+slice would triple HBM traffic). XLA's fused x*sigmoid(x) is
    # already at roofline for these.
    if cols is None or n * itemsize < _MIN_PALLAS_BYTES:
        return (x * jax.nn.sigmoid(x)).astype(dtype)

    rows = n // cols
    x2d = jnp.ravel(x).reshape(rows, cols)

    sub = _sublane_multiple(itemsize)

    # Block rows sized for ~target_block_bytes per block, rounded to the
    # dtype's packed sublane multiple when possible.
    tile_rows = max(1, target_block_bytes // (cols * itemsize))
    tile_rows = min(tile_rows, rows)
    if rows >= sub:
        tile_rows = max(sub, (tile_rows // sub) * sub)
    else:
        tile_rows = rows  # block dim equals full array dim -> layout OK

    # Ensure >= 2 grid blocks so the parallel axis can be split across the two
    # TensorCores on v7x (harmless on 1-TC chips).
    if pl.cdiv(rows, tile_rows) < 2 and rows >= 2 * sub:
        half = (rows + 1) // 2
        tile_rows = max(sub, (half // sub) * sub)

    grid = (pl.cdiv(rows, tile_rows),)

    block_bytes = tile_rows * cols * itemsize
    # Budget: double-buffered input + double-buffered output + headroom,
    # capped at half the chip's physical VMEM (generation-aware).
    vmem_cap = _vmem_capacity_bytes()
    vmem_limit = int(min(vmem_cap // 2,
                         max(16 * 1024 * 1024, 6 * block_bytes)))

    # Compute dtype: bf16/f16 inputs use native 16-bit math where the EUP
    # supports it (v6e/v7x), otherwise f32 (always safe; free for a
    # bandwidth-bound kernel on v5e).
    if (jnp.issubdtype(dtype, jnp.floating) and itemsize == 2
            and _supports_native_16bit_math()):
        compute_dtype = dtype
    else:
        compute_dtype = jnp.float32

    out2d = pl.pallas_call(
        functools.partial(_silu_kernel, compute_dtype=compute_dtype),
        out_shape=jax.ShapeDtypeStruct((rows, cols), dtype),
        grid_spec=pltpu.PrefetchScalarGridSpec(
            num_scalar_prefetch=0,
            grid=grid,
            in_specs=[pl.BlockSpec((tile_rows, cols), lambda i: (i, 0))],
            out_specs=pl.BlockSpec((tile_rows, cols), lambda i: (i, 0)),
        ),
        compiler_params=pltpu.CompilerParams(
            dimension_semantics=("parallel",),
            vmem_limit_bytes=vmem_limit,
        ),
        cost_estimate=pl.CostEstimate(
            flops=4 * n,
            transcendentals=n,
            bytes_accessed=2 * n * itemsize,
        ),
    )(x2d)

    return out2d.reshape(orig_shape)


if __name__ == "__main__":
    key = jax.random.PRNGKey(0)
    k1, k2, k3 = jax.random.split(key, 3)

    # Small NCHW tensor like the PyTorch module would see (takes the
    # tiny-input fast path).
    x_small = jax.random.normal(k1, (2, 4, 16, 16), dtype=jnp.float32)
    y_small = silu(x_small)
    jax.block_until_ready(y_small)
    ref_small = x_small * jax.nn.sigmoid(x_small)
    assert y_small.shape == x_small.shape and y_small.dtype == x_small.dtype
    assert jnp.allclose(y_small, ref_small, atol=1e-5, rtol=1e-5)

    # Larger activation map that exercises the Pallas kernel path (>= 1 MiB,
    # lane-dense slab, >= 2 grid blocks).
    x_big = jax.random.normal(k2, (2, 64, 64, 64), dtype=jnp.float32)
    y_big = silu(x_big)
    jax.block_until_ready(y_big)
    ref_big = x_big * jax.nn.sigmoid(x_big)
    assert y_big.shape == x_big.shape and y_big.dtype == x_big.dtype
    assert jnp.allclose(y_big, ref_big, atol=1e-5, rtol=1e-5)

    # Ragged element count (not a multiple of 128) -> clean XLA fallback,
    # no pad/slice round trips.
    x_rag = jax.random.normal(k3, (3, 5, 7, 3), dtype=jnp.float32)
    y_rag = silu(x_rag)
    jax.block_until_ready(y_rag)
    ref_rag = x_rag * jax.nn.sigmoid(x_rag)
    assert y_rag.shape == x_rag.shape and y_rag.dtype == x_rag.dtype
    assert jnp.allclose(y_rag, ref_rag, atol=1e-5, rtol=1e-5)

    print("KERNEL_OK")
</pallas_src>

<mosaic_0001>
module attributes {stable_mosaic.version = 11 : i64} {
  func.func @_silu_kernel(%arg0: i32, %arg1: memref<32x8192xf32, #tpu.memory_space<vmem>>, %arg2: memref<32x8192xf32, #tpu.memory_space<vmem>>) attributes {dimension_semantics = [#tpu.dimension_semantics<parallel>], iteration_bounds = array<i64: 2>, scalar_prefetch = 0 : i64, scratch_operands = 0 : i64, tpu.core_type = #tpu.core_type<tc>, window_params = [{transform_indices = @transform_0, window_bounds = array<i64: 32, 8192>}, {transform_indices = @transform_1, window_bounds = array<i64: 32, 8192>}]} {
    %c0 = arith.constant 0 : index
    %c0_0 = arith.constant 0 : index
    %0 = vector.load %arg1[%c0, %c0_0] : memref<32x8192xf32, #tpu.memory_space<vmem>>, vector<32x8192xf32>
    %1 = arith.negf %0 : vector<32x8192xf32>
    %2 = math.exp %1 : vector<32x8192xf32>
    %cst = arith.constant 1.000000e+00 : f32
    %3 = vector.broadcast %cst : f32 to vector<32x8192xf32>
    %4 = arith.addf %3, %2 : vector<32x8192xf32>
    %5 = arith.divf %3, %4 : vector<32x8192xf32>
    %6 = arith.mulf %0, %5 : vector<32x8192xf32>
    %c0_1 = arith.constant 0 : index
    %c0_2 = arith.constant 0 : index
    %7 = vector.load %arg2[%c0_1, %c0_2] : memref<32x8192xf32, #tpu.memory_space<vmem>>, vector<32x8192xf32>
    tpu.vector_store %arg2[%c0_1, %c0_2], %6 {strides = array<i32>} : memref<32x8192xf32, #tpu.memory_space<vmem>>, vector<32x8192xf32>,
    return
  }
  func.func @transform_0(%arg0: i32) -> (i32, i32) {
    %c0_i32 = arith.constant 0 : i32
    %c0_i32_0 = arith.constant 0 : i32
    return %arg0, %c0_i32 : i32, i32
  }
  func.func @transform_1(%arg0: i32) -> (i32, i32) {
    %c0_i32 = arith.constant 0 : i32
    %c0_i32_0 = arith.constant 0 : i32
    return %arg0, %c0_i32 : i32, i32
  }
}

</mosaic_0001>

<llo_original>
// kernel: tpu_custom_call.1
$region0: #{tpu_custom_call.1}
  #allocation0 [shape = 'u32[]', space=smem, size = 0x4, offset = 0x4, fixed_abs, tag = 'smem constant byte address 0x4 - core index']
  #allocation1 [shape = 'u32[144,128]{1,0:T(1,128)}', space=vmem, size = 0x12000, scoped, tag = 'internal scratch']
  %s0 = inlined_call_operand.hbm [shape: f32[64,8192], index: 0, kind: input, shape index: {}]
  %s1 = inlined_call_operand.hbm [shape: f32[64,8192], index: 1, kind: output, shape index: {}]
  %s2 = sld [smem:[#allocation0]]
  $region41: #{tpu_custom_call.1} parent=0
    _
  %s4 = ssub.s32 1, %s2
  %s5 = scalar_select 0, %s4, %s2
  $region1: #{tpu_custom_call.1} parent=0
    #allocation2 [shape = 'u8[2097152]{0}', space=vmem, size = 0x200000, scoped, tag = 'input window, operand 0']
    #allocation3 [shape = 's32[2]{0}', space=sflag, size = 0x8, scoped, tag = 'scoped memory for tpu_custom_call.1']
    #allocation4 [shape = 's32[2]{0}', space=sflag, size = 0x8, scoped, tag = 'scoped memory for tpu_custom_call.1']
    #allocation5 [shape = 'u8[2097152]{0}', space=vmem, size = 0x200000, scoped, tag = 'output window, operand 0']
    %6 = vsyncpa [#allocation3], 0
    %s7 = scalar_lea.sflag [#allocation3], 1
    %8 = vsyncpa %s7, 0
    %9 = vsyncpa [#allocation4], 0
    %s10 = scalar_lea.sflag [#allocation4], 1
    %11 = vsyncpa %s10, 0
    loop: start=0, step=1, limit=4
    $region2: #{tpu_custom_call.1} parent=1 // loop_pre_header
      _
    $region3: #{tpu_custom_call.1} parent=1 // loop_header
      %s13 = sphi 0, %s17
      %p14 = scmp.ge.s32.totalorder %s13, 4
      %s23 = sphi 0, %s25
      %s26 = sphi 0, %s23
      %s27 = sphi 0, %s26
      %s43 = sphi 0, %s27
      %s49 = sphi 0, %s51
      %s52 = sphi 0, %s49
      %s53 = sphi 0, %s52
      %s69 = sphi 0, %s53
    $region4: #{tpu_custom_call.1} parent=1 // loop_header_branch
      %16 = sbr.rel (%p14) target = $region8
    $region5: #{tpu_custom_call.1} parent=1 // loop_body
      %s18 = ssub.s32 %s13, 1
      %s19 = ssub.s32 %s13, 2
      %s20 = sadd.s32 %s13, 1
      %s21 = ssub.s32 %s13, %s20
      %p22 = scmp.eq.s32.totalorder %s21, 0
      %s24 = sadd.s32 %s23, 1
      %s25 = scalar_select %p22, %s23, %s24
      %p28 = pneg %p22
      %p29 = scmp.eq.s32.totalorder %s13, 1
      %p30 = por %p28, %p29
      %p31 = scmp.ne.s32.totalorder %s23, %s26
      %p32 = scmp.eq.s32.totalorder %s13, 0
      %p33 = por %p31, %p32
      %p34 = scmp.ne.s32.totalorder %s23, %s26
      %p35 = scmp.eq.s32.totalorder %s18, 1
      %p36 = por %p34, %p35
      %p37 = scmp.ne.s32.totalorder %s26, %s27
      %p38 = scmp.eq.s32.totalorder %s18, 0
      %p39 = por %p37, %p38
      %p40 = scmp.ne.s32.totalorder %s26, %s27
      %p41 = scmp.eq.s32.totalorder %s19, 1
      %p42 = por %p40, %p41
      %p44 = scmp.ne.s32.totalorder %s27, %s43
      %p45 = scmp.eq.s32.totalorder %s19, 0
      %p46 = por %p44, %p45
      %s47 = ssub.s32 %s13, %s20
      %p48 = scmp.eq.s32.totalorder %s47, 0
      %s50 = sadd.s32 %s49, 1
      %s51 = scalar_select %p48, %s49, %s50
      %p54 = pneg %p48
      %p55 = scmp.eq.s32.totalorder %s13, 1
      %p56 = por %p54, %p55
      %p57 = scmp.ne.s32.totalorder %s49, %s52
      %p58 = scmp.eq.s32.totalorder %s13, 0
      %p59 = por %p57, %p58
      %p60 = scmp.ne.s32.totalorder %s49, %s52
      %p61 = scmp.eq.s32.totalorder %s18, 1
      %p62 = por %p60, %p61
      %p63 = scmp.ne.s32.totalorder %s52, %s53
      %p64 = scmp.eq.s32.totalorder %s18, 0
      %p65 = por %p63, %p64
      %p66 = scmp.ne.s32.totalorder %s52, %s53
      %p67 = scmp.eq.s32.totalorder %s19, 1
      %p68 = por %p66, %p67
      %p70 = scmp.ne.s32.totalorder %s53, %s69
      %p71 = scmp.eq.s32.totalorder %s19, 0
      %p72 = por %p70, %p71
      %p73 = scmp.le.s32.totalorder 1, %s13
      %p74 = scmp.lt.s32.totalorder %s13, 3
      %p75 = pnand %p73, %p74
      %p76 = pneg %p75
      // Predicated region
      $region9: #{tpu_custom_call.1} parent=5 // pred_check
        _
      $region10: #{tpu_custom_call.1} parent=5 // pred_check_branch
        %78 = sbr.rel (%p75) target = $region12
      $region11: #{tpu_custom_call.1} parent=5 // pred_region
        %s79 = ssub.s32 %s13, 1
      $region12: #{tpu_custom_call.1} parent=5 // pred_fallthru
        _
      %p80 = scmp.lt.s32.totalorder %s13, 2
      // Predicated region
      $region13: #{tpu_custom_call.1} parent=5 // pred_check
        %p81 = pneg %p80
      $region14: #{tpu_custom_call.1} parent=5 // pred_check_branch
        %83 = sbr.rel (%p81) target = $region16
      $region15: #{tpu_custom_call.1} parent=5 // pred_region
        // Predicated region
        $region17: #{tpu_custom_call.1} parent=15 // pred_check
          %p84 = pneg %p33
        $region18: #{tpu_custom_call.1} parent=15 // pred_check_branch
          %86 = sbr.rel (%p84) target = $region20
        $region19: #{tpu_custom_call.1} parent=15 // pred_region
          %s87 = sand.u32 %s23, 1
          %s88 = scalar_lea.sflag [#allocation3], %s87
          %s89 = sand.u32 %s23, 1
          %s90 = smul.addr %s89, 2048
          %s91 = scalar_lea.vmem [#allocation2], %s90
          %s92 = smul.u32 4, %s13
          %s94 = ssub.s32 32768, 32768
          %95 = vsyncadd %s88, %s94
          %s96 = smul.addr %s92, 64
          %s97 = smul.addr %s96, 128
          %s98 = scalar_lea.hbm %s0, %s97
          %s99 = sshll.u32 %s91, 4
          %s100 = int_to_ptr.vmem [resolvable:$true] %s99
          %105 = dma.hbm_to_vmem [thread:$0]  %s98, 32768, %s100, %s88, 8192, 8192, 512
        $region20: #{tpu_custom_call.1} parent=15 // pred_fallthru
          _
      $region16: #{tpu_custom_call.1} parent=5 // pred_fallthru
        _
      %p106 = scmp.le.s32.totalorder 1, %s13
      %p107 = scmp.lt.s32.totalorder %s13, 3
      %p108 = pnand %p106, %p107
      %p109 = pneg %p108
      // Predicated region
      $region21: #{tpu_custom_call.1} parent=5 // pred_check
        _
      $region22: #{tpu_custom_call.1} parent=5 // pred_check_branch
        %111 = sbr.rel (%p108) target = $region24
      $region23: #{tpu_custom_call.1} parent=5 // pred_region
        %s112 = ssub.s32 %s13, 1
        %s113 = sand.u32 %s26, 1
        %s114 = scalar_lea.sflag [#allocation3], %s113
        %s115 = sand.u32 %s26, 1
        %s116 = smul.addr %s115, 2048
        %s117 = scalar_lea.vmem [#allocation2], %s116
        // Predicated region
        $region25: #{tpu_custom_call.1} parent=23 // pred_check
          %p118 = pneg %p39
        $region26: #{tpu_custom_call.1} parent=23 // pred_check_branch
          %120 = sbr.rel (%p118) target = $region28
        $region27: #{tpu_custom_call.1} parent=23 // pred_region
          %121 = dma.done %s114, 32768
        $region28: #{tpu_custom_call.1} parent=23 // pred_fallthru
          _
        %s122 = sand.u32 %s26, 1
        %s123 = scalar_lea.sflag [#allocation3], %s122
        %s124 = sand.u32 %s26, 1
        %s125 = smul.addr %s124, 2048
        %s126 = scalar_lea.vmem [#allocation2], %s125
        %p127 = pneg %p39
        %p128 = pneg %p36
        %p129 = pneg %p65
        %p130 = pneg %p62
        %s131 = sand.u32 %s52, 1
        %s132 = scalar_lea.sflag [#allocation4], %s131
        %s133 = sand.u32 %s52, 1
        %s134 = smul.addr %s133, 2048
        %s135 = scalar_lea.vmem [#allocation5], %s134
        %s136 = smul.u32 4, %s18
        %s137 = smul.u32 4, %s18
        %v138 = vld [vmem:[%s117] sm:$0xff]
        %v139 = vld [vmem:[%s117 + $0x8] sm:$0xff]
        %v140 = vld [vmem:[%s117 + $0x10] sm:$0xff]
        %v141 = vld [vmem:[%s117 + $0x18] sm:$0xff]
        %v142 = vld [vmem:[%s117 + $0x20] sm:$0xff]
        %v143 = vld [vmem:[%s117 + $0x28] sm:$0xff]
        %v144 = vld [vmem:[%s117 + $0x30] sm:$0xff]
        %v145 = vld [vmem:[%s117 + $0x38] sm:$0xff]
        %v146 = vld [vmem:[%s117 + $0x40] sm:$0xff]
        %v147 = vld [vmem:[%s117 + $0x48] sm:$0xff]
        %v148 = vld [vmem:[%s117 + $0x50] sm:$0xff]
        %v149 = vld [vmem:[%s117 + $0x58] sm:$0xff]
        %v150 = vld [vmem:[%s117 + $0x60] sm:$0xff]
        %v151 = vld [vmem:[%s117 + $0x68] sm:$0xff]
        %v152 = vld [vmem:[%s117 + $0x70] sm:$0xff]
        %v153 = vld [vmem:[%s117 + $0x78] sm:$0xff]
        %v154 = vld [vmem:[%s117 + $0x80] sm:$0xff]
        %v155 = vld [vmem:[%s117 + $0x88] sm:$0xff]
        %v156 = vld [vmem:[%s117 + $0x90] sm:$0xff]
        %v157 = vld [vmem:[%s117 + $0x98] sm:$0xff]
        %v158 = vld [vmem:[%s117 + $0xa0] sm:$0xff]
        %v159 = vld [vmem:[%s117 + $0xa8] sm:$0xff]
        %v160 = vld [vmem:[%s117 + $0xb0] sm:$0xff]
        %v161 = vld [vmem:[%s117 + $0xb8] sm:$0xff]
        %v162 = vld [vmem:[%s117 + $0xc0] sm:$0xff]
        %v163 = vld [vmem:[%s117 + $0xc8] sm:$0xff]
        %v164 = vld [vmem:[%s117 + $0xd0] sm:$0xff]
        %v165 = vld [vmem:[%s117 + $0xd8] sm:$0xff]
        %v166 = vld [vmem:[%s117 + $0xe0] sm:$0xff]
        %v167 = vld [vmem:[%s117 + $0xe8] sm:$0xff]
        %v168 = vld [vmem:[%s117 + $0xf0] sm:$0xff]
        %v169 = vld [vmem:[%s117 + $0xf8] sm:$0xff]
        %v170 = vld [vmem:[%s117 + $0x100] sm:$0xff]
        %v171 = vld [vmem:[%s117 + $0x108] sm:$0xff]
        %v172 = vld [vmem:[%s117 + $0x110] sm:$0xff]
        %v173 = vld [vmem:[%s117 + $0x118] sm:$0xff]
        %v174 = vld [vmem:[%s117 + $0x120] sm:$0xff]
        %v175 = vld [vmem:[%s117 + $0x128] sm:$0xff]
        %v176 = vld [vmem:[%s117 + $0x130] sm:$0xff]
        %v177 = vld [vmem:[%s117 + $0x138] sm:$0xff]
        %v178 = vld [vmem:[%s117 + $0x140] sm:$0xff]
        %v179 = vld [vmem:[%s117 + $0x148] sm:$0xff]
        %v180 = vld [vmem:[%s117 + $0x150] sm:$0xff]
        %v181 = vld [vmem:[%s117 + $0x158] sm:$0xff]
        %v182 = vld [vmem:[%s117 + $0x160] sm:$0xff]
        %v183 = vld [vmem:[%s117 + $0x168] sm:$0xff]
        %v184 = vld [vmem:[%s117 + $0x170] sm:$0xff]
        %v185 = vld [vmem:[%s117 + $0x178] sm:$0xff]
        %v186 = vld [vmem:[%s117 + $0x180] sm:$0xff]
        %v187 = vld [vmem:[%s117 + $0x188] sm:$0xff]
        %v188 = vld [vmem:[%s117 + $0x190] sm:$0xff]
        %v189 = vld [vmem:[%s117 + $0x198] sm:$0xff]
        %v190 = vld [vmem:[%s117 + $0x1a0] sm:$0xff]
        %v191 = vld [vmem:[%s117 + $0x1a8] sm:$0xff]
        %v192 = vld [vmem:[%s117 + $0x1b0] sm:$0xff]
        %v193 = vld [vmem:[%s117 + $0x1b8] sm:$0xff]
        %v194 = vld [vmem:[%s117 + $0x1c0] sm:$0xff]
        %v195 = vld [vmem:[%s117 + $0x1c8] sm:$0xff]
        %v196 = vld [vmem:[%s117 + $0x1d0] sm:$0xff]
        %v197 = vld [vmem:[%s117 + $0x1d8] sm:$0xff]
        %v198 = vld [vmem:[%s117 + $0x1e0] sm:$0xff]
        %v199 = vld [vmem:[%s117 + $0x1e8] sm:$0xff]
        %v200 = vld [vmem:[%s117 + $0x1f0] sm:$0xff]
        %v201 = vld [vmem:[%s117 + $0x1f8] sm:$0xff]
        %v202 = vld [vmem:[%s117 + $0x200] sm:$0xff]
        %v203 = vld [vmem:[%s117 + $0x208] sm:$0xff]
        %v204 = vld [vmem:[%s117 + $0x210] sm:$0xff]
        %v205 = vld [vmem:[%s117 + $0x218] sm:$0xff]
        %v206 = vld [vmem:[%s117 + $0x220] sm:$0xff]
        %v207 = vld [vmem:[%s117 + $0x228] sm:$0xff]
        %v208 = vld [vmem:[%s117 + $0x230] sm:$0xff]
        %v209 = vld [vmem:[%s117 + $0x238] sm:$0xff]
        %v210 = vld [vmem:[%s117 + $0x240] sm:$0xff]
        %v211 = vld [vmem:[%s117 + $0x248] sm:$0xff]
        %v212 = vld [vmem:[%s117 + $0x250] sm:$0xff]
        %v213 = vld [vmem:[%s117 + $0x258] sm:$0xff]
        %v214 = vld [vmem:[%s117 + $0x260] sm:$0xff]
        %v215 = vld [vmem:[%s117 + $0x268] sm:$0xff]
        %v216 = vld [vmem:[%s117 + $0x270] sm:$0xff]
        %v217 = vld [vmem:[%s117 + $0x278] sm:$0xff]
        %v218 = vld [vmem:[%s117 + $0x280] sm:$0xff]
        %v219 = vld [vmem:[%s117 + $0x288] sm:$0xff]
        %v220 = vld [vmem:[%s117 + $0x290] sm:$0xff]
        %v221 = vld [vmem:[%s117 + $0x298] sm:$0xff]
        %v222 = vld [vmem:[%s117 + $0x2a0] sm:$0xff]
        %v223 = vld [vmem:[%s117 + $0x2a8] sm:$0xff]
        %v224 = vld [vmem:[%s117 + $0x2b0] sm:$0xff]
        %v225 = vld [vmem:[%s117 + $0x2b8] sm:$0xff]
        %v226 = vld [vmem:[%s117 + $0x2c0] sm:$0xff]
        %v227 = vld [vmem:[%s117 + $0x2c8] sm:$0xff]
        %v228 = vld [vmem:[%s117 + $0x2d0] sm:$0xff]
        %v229 = vld [vmem:[%s117 + $0x2d8] sm:$0xff]
        %v230 = vld [vmem:[%s117 + $0x2e0] sm:$0xff]
        %v231 = vld [vmem:[%s117 + $0x2e8] sm:$0xff]
        %v232 = vld [vmem:[%s117 + $0x2f0] sm:$0xff]
        %v233 = vld [vmem:[%s117 + $0x2f8] sm:$0xff]
        %v234 = vld [vmem:[%s117 + $0x300] sm:$0xff]
        %v235 = vld [vmem:[%s117 + $0x308] sm:$0xff]
        %v236 = vld [vmem:[%s117 + $0x310] sm:$0xff]
        %v237 = vld [vmem:[%s117 + $0x318] sm:$0xff]
        %v238 = vld [vmem:[%s117 + $0x320] sm:$0xff]
        %v239 = vld [vmem:[%s117 + $0x328] sm:$0xff]
        %v240 = vld [vmem:[%s117 + $0x330] sm:$0xff]
        %v241 = vld [vmem:[%s117 + $0x338] sm:$0xff]
        %v242 = vld [vmem:[%s117 + $0x340] sm:$0xff]
        %v243 = vld [vmem:[%s117 + $0x348] sm:$0xff]
        %v244 = vld [vmem:[%s117 + $0x350] sm:$0xff]
        %v245 = vld [vmem:[%s117 + $0x358] sm:$0xff]
        %v246 = vld [vmem:[%s117 + $0x360] sm:$0xff]
        %v247 = vld [vmem:[%s117 + $0x368] sm:$0xff]
        %v248 = vld [vmem:[%s117 + $0x370] sm:$0xff]
        %v249 = vld [vmem:[%s117 + $0x378] sm:$0xff]
        %v250 = vld [vmem:[%s117 + $0x380] sm:$0xff]
        %v251 = vld [vmem:[%s117 + $0x388] sm:$0xff]
        %v252 = vld [vmem:[%s117 + $0x390] sm:$0xff]
        %v253 = vld [vmem:[%s117 + $0x398] sm:$0xff]
        %v254 = vld [vmem:[%s117 + $0x3a0] sm:$0xff]
        %v255 = vld [vmem:[%s117 + $0x3a8] sm:$0xff]
        %v256 = vld [vmem:[%s117 + $0x3b0] sm:$0xff]
        %v257 = vld [vmem:[%s117 + $0x3b8] sm:$0xff]
        %v258 = vld [vmem:[%s117 + $0x3c0] sm:$0xff]
        %v259 = vld [vmem:[%s117 + $0x3c8] sm:$0xff]
        %v260 = vld [vmem:[%s117 + $0x3d0] sm:$0xff]
        %v261 = vld [vmem:[%s117 + $0x3d8] sm:$0xff]
        %v262 = vld [vmem:[%s117 + $0x3e0] sm:$0xff]
        %v263 = vld [vmem:[%s117 + $0x3e8] sm:$0xff]
        %v264 = vld [vmem:[%s117 + $0x3f0] sm:$0xff]
        %v265 = vld [vmem:[%s117 + $0x3f8] sm:$0xff]
        %v266 = vld [vmem:[%s117 + $0x400] sm:$0xff]
        %v267 = vld [vmem:[%s117 + $0x408] sm:$0xff]
        %v268 = vld [vmem:[%s117 + $0x410] sm:$0xff]
        %v269 = vld [vmem:[%s117 + $0x418] sm:$0xff]
        %v270 = vld [vmem:[%s117 + $0x420] sm:$0xff]
        %v271 = vld [vmem:[%s117 + $0x428] sm:$0xff]
        %v272 = vld [vmem:[%s117 + $0x430] sm:$0xff]
        %v273 = vld [vmem:[%s117 + $0x438] sm:$0xff]
        %v274 = vld [vmem:[%s117 + $0x440] sm:$0xff]
        %v275 = vld [vmem:[%s117 + $0x448] sm:$0xff]
        %v276 = vld [vmem:[%s117 + $0x450] sm:$0xff]
        %v277 = vld [vmem:[%s117 + $0x458] sm:$0xff]
        %v278 = vld [vmem:[%s117 + $0x460] sm:$0xff]
        %v279 = vld [vmem:[%s117 + $0x468] sm:$0xff]
        %v280 = vld [vmem:[%s117 + $0x470] sm:$0xff]
        %v281 = vld [vmem:[%s117 + $0x478] sm:$0xff]
        %v282 = vld [vmem:[%s117 + $0x480] sm:$0xff]
        %v283 = vld [vmem:[%s117 + $0x488] sm:$0xff]
        %v284 = vld [vmem:[%s117 + $0x490] sm:$0xff]
        %v285 = vld [vmem:[%s117 + $0x498] sm:$0xff]
        %v286 = vld [vmem:[%s117 + $0x4a0] sm:$0xff]
        %v287 = vld [vmem:[%s117 + $0x4a8] sm:$0xff]
        %v288 = vld [vmem:[%s117 + $0x4b0] sm:$0xff]
        %v289 = vld [vmem:[%s117 + $0x4b8] sm:$0xff]
        %v290 = vld [vmem:[%s117 + $0x4c0] sm:$0xff]
        %v291 = vld [vmem:[%s117 + $0x4c8] sm:$0xff]
        %v292 = vld [vmem:[%s117 + $0x4d0] sm:$0xff]
        %v293 = vld [vmem:[%s117 + $0x4d8] sm:$0xff]
        %v294 = vld [vmem:[%s117 + $0x4e0] sm:$0xff]
        %v295 = vld [vmem:[%s117 + $0x4e8] sm:$0xff]
        %v296 = vld [vmem:[%s117 + $0x4f0] sm:$0xff]
        %v297 = vld [vmem:[%s117 + $0x4f8] sm:$0xff]
        %v298 = vld [vmem:[%s117 + $0x500] sm:$0xff]
        %v299 = vld [vmem:[%s117 + $0x508] sm:$0xff]
        %v300 = vld [vmem:[%s117 + $0x510] sm:$0xff]
        %v301 = vld [vmem:[%s117 + $0x518] sm:$0xff]
        %v302 = vld [vmem:[%s117 + $0x520] sm:$0xff]
        %v303 = vld [vmem:[%s117 + $0x528] sm:$0xff]
        %v304 = vld [vmem:[%s117 + $0x530] sm:$0xff]
        %v305 = vld [vmem:[%s117 + $0x538] sm:$0xff]
        %v306 = vld [vmem:[%s117 + $0x540] sm:$0xff]
        %v307 = vld [vmem:[%s117 + $0x548] sm:$0xff]
        %v308 = vld [vmem:[%s117 + $0x550] sm:$0xff]
        %v309 = vld [vmem:[%s117 + $0x558] sm:$0xff]
        %v310 = vld [vmem:[%s117 + $0x560] sm:$0xff]
        %v311 = vld [vmem:[%s117 + $0x568] sm:$0xff]
        %v312 = vld [vmem:[%s117 + $0x570] sm:$0xff]
        %v313 = vld [vmem:[%s117 + $0x578] sm:$0xff]
        %v314 = vld [vmem:[%s117 + $0x580] sm:$0xff]
        %v315 = vld [vmem:[%s117 + $0x588] sm:$0xff]
        %v316 = vld [vmem:[%s117 + $0x590] sm:$0xff]
        %v317 = vld [vmem:[%s117 + $0x598] sm:$0xff]
        %v318 = vld [vmem:[%s117 + $0x5a0] sm:$0xff]
        %v319 = vld [vmem:[%s117 + $0x5a8] sm:$0xff]
        %v320 = vld [vmem:[%s117 + $0x5b0] sm:$0xff]
        %v321 = vld [vmem:[%s117 + $0x5b8] sm:$0xff]
        %v322 = vld [vmem:[%s117 + $0x5c0] sm:$0xff]
        %v323 = vld [vmem:[%s117 + $0x5c8] sm:$0xff]
        %v324 = vld [vmem:[%s117 + $0x5d0] sm:$0xff]
        %v325 = vld [vmem:[%s117 + $0x5d8] sm:$0xff]
        %v326 = vld [vmem:[%s117 + $0x5e0] sm:$0xff]
        %v327 = vld [vmem:[%s117 + $0x5e8] sm:$0xff]
        %v328 = vld [vmem:[%s117 + $0x5f0] sm:$0xff]
        %v329 = vld [vmem:[%s117 + $0x5f8] sm:$0xff]
        %v330 = vld [vmem:[%s117 + $0x600] sm:$0xff]
        %v331 = vld [vmem:[%s117 + $0x608] sm:$0xff]
        %v332 = vld [vmem:[%s117 + $0x610] sm:$0xff]
        %v333 = vld [vmem:[%s117 + $0x618] sm:$0xff]
        %v334 = vld [vmem:[%s117 + $0x620] sm:$0xff]
        %v335 = vld [vmem:[%s117 + $0x628] sm:$0xff]
        %v336 = vld [vmem:[%s117 + $0x630] sm:$0xff]
        %v337 = vld [vmem:[%s117 + $0x638] sm:$0xff]
        %v338 = vld [vmem:[%s117 + $0x640] sm:$0xff]
        %v339 = vld [vmem:[%s117 + $0x648] sm:$0xff]
        %v340 = vld [vmem:[%s117 + $0x650] sm:$0xff]
        %v341 = vld [vmem:[%s117 + $0x658] sm:$0xff]
        %v342 = vld [vmem:[%s117 + $0x660] sm:$0xff]
        %v343 = vld [vmem:[%s117 + $0x668] sm:$0xff]
        %v344 = vld [vmem:[%s117 + $0x670] sm:$0xff]
        %v345 = vld [vmem:[%s117 + $0x678] sm:$0xff]
        %v346 = vld [vmem:[%s117 + $0x680] sm:$0xff]
        %v347 = vld [vmem:[%s117 + $0x688] sm:$0xff]
        %v348 = vld [vmem:[%s117 + $0x690] sm:$0xff]
        %v349 = vld [vmem:[%s117 + $0x698] sm:$0xff]
        %v350 = vld [vmem:[%s117 + $0x6a0] sm:$0xff]
        %v351 = vld [vmem:[%s117 + $0x6a8] sm:$0xff]
        %v352 = vld [vmem:[%s117 + $0x6b0] sm:$0xff]
        %v353 = vld [vmem:[%s117 + $0x6b8] sm:$0xff]
        %v354 = vld [vmem:[%s117 + $0x6c0] sm:$0xff]
        %v355 = vld [vmem:[%s117 + $0x6c8] sm:$0xff]
        %v356 = vld [vmem:[%s117 + $0x6d0] sm:$0xff]
        %v357 = vld [vmem:[%s117 + $0x6d8] sm:$0xff]
        %v358 = vld [vmem:[%s117 + $0x6e0] sm:$0xff]
        %v359 = vld [vmem:[%s117 + $0x6e8] sm:$0xff]
        %v360 = vld [vmem:[%s117 + $0x6f0] sm:$0xff]
        %v361 = vld [vmem:[%s117 + $0x6f8] sm:$0xff]
        %v362 = vld [vmem:[%s117 + $0x700] sm:$0xff]
        %v363 = vld [vmem:[%s117 + $0x708] sm:$0xff]
        %v364 = vld [vmem:[%s117 + $0x710] sm:$0xff]
        %v365 = vld [vmem:[%s117 + $0x718] sm:$0xff]
        %v366 = vld [vmem:[%s117 + $0x720] sm:$0xff]
        %v367 = vld [vmem:[%s117 + $0x728] sm:$0xff]
        %v368 = vld [vmem:[%s117 + $0x730] sm:$0xff]
        %v369 = vld [vmem:[%s117 + $0x738] sm:$0xff]
        %v370 = vld [vmem:[%s117 + $0x740] sm:$0xff]
        %v371 = vld [vmem:[%s117 + $0x748] sm:$0xff]
        %v372 = vld [vmem:[%s117 + $0x750] sm:$0xff]
        %v373 = vld [vmem:[%s117 + $0x758] sm:$0xff]
        %v374 = vld [vmem:[%s117 + $0x760] sm:$0xff]
        %v375 = vld [vmem:[%s117 + $0x768] sm:$0xff]
        %v376 = vld [vmem:[%s117 + $0x770] sm:$0xff]
        %v377 = vld [vmem:[%s117 + $0x778] sm:$0xff]
        %v378 = vld [vmem:[%s117 + $0x780] sm:$0xff]
        %v379 = vld [vmem:[%s117 + $0x788] sm:$0xff]
        %v380 = vld [vmem:[%s117 + $0x790] sm:$0xff]
        %v381 = vld [vmem:[%s117 + $0x798] sm:$0xff]
        %v382 = vld [vmem:[%s117 + $0x7a0] sm:$0xff]
        %v383 = vld [vmem:[%s117 + $0x7a8] sm:$0xff]
        %v384 = vld [vmem:[%s117 + $0x7b0] sm:$0xff]
        %v385 = vld [vmem:[%s117 + $0x7b8] sm:$0xff]
        %v386 = vld [vmem:[%s117 + $0x7c0] sm:$0xff]
        %v387 = vld [vmem:[%s117 + $0x7c8] sm:$0xff]
        %v388 = vld [vmem:[%s117 + $0x7d0] sm:$0xff]
        %v389 = vld [vmem:[%s117 + $0x7d8] sm:$0xff]
        %v390 = vld [vmem:[%s117 + $0x7e0] sm:$0xff]
        %v391 = vld [vmem:[%s117 + $0x7e8] sm:$0xff]
        %v392 = vld [vmem:[%s117 + $0x7f0] sm:$0xff]
        %v393 = vld [vmem:[%s117 + $0x7f8] sm:$0xff]
        %v394 = vxor.u32 %v138, 2147483648
        %v395 = vxor.u32 %v139, 2147483648
        %v396 = vxor.u32 %v140, 2147483648
        %v397 = vxor.u32 %v141, 2147483648
        %v398 = vxor.u32 %v142, 2147483648
        %v399 = vxor.u32 %v143, 2147483648
        %v400 = vxor.u32 %v144, 2147483648
        %v401 = vxor.u32 %v145, 2147483648
        %v402 = vxor.u32 %v146, 2147483648
        %v403 = vxor.u32 %v147, 2147483648
        %v404 = vxor.u32 %v148, 2147483648
        %v405 = vxor.u32 %v149, 2147483648
        %v406 = vxor.u32 %v150, 2147483648
        %v407 = vxor.u32 %v151, 2147483648
        %v408 = vxor.u32 %v152, 2147483648
        %v409 = vxor.u32 %v153, 2147483648
        %v410 = vxor.u32 %v154, 2147483648
        %v411 = vxor.u32 %v155, 2147483648
        %v412 = vxor.u32 %v156, 2147483648
        %v413 = vxor.u32 %v157, 2147483648
        %v414 = vxor.u32 %v158, 2147483648
        %v415 = vxor.u32 %v159, 2147483648
        %v416 = vxor.u32 %v160, 2147483648
        %v417 = vxor.u32 %v161, 2147483648
        %v418 = vxor.u32 %v162, 2147483648
        %v419 = vxor.u32 %v163, 2147483648
        %v420 = vxor.u32 %v164, 2147483648
        %v421 = vxor.u32 %v165, 2147483648
        %v422 = vxor.u32 %v166, 2147483648
        %v423 = vxor.u32 %v167, 2147483648
        %v424 = vxor.u32 %v168, 2147483648
        %v425 = vxor.u32 %v169, 2147483648
        %v426 = vxor.u32 %v170, 2147483648
        %v427 = vxor.u32 %v171, 2147483648
        %v428 = vxor.u32 %v172, 2147483648
        %v429 = vxor.u32 %v173, 2147483648
        %v430 = vxor.u32 %v174, 2147483648
        %v431 = vxor.u32 %v175, 2147483648
        %v432 = vxor.u32 %v176, 2147483648
        %v433 = vxor.u32 %v177, 2147483648
        %v434 = vxor.u32 %v178, 2147483648
        %v435 = vxor.u32 %v179, 2147483648
        %v436 = vxor.u32 %v180, 2147483648
        %v437 = vxor.u32 %v181, 2147483648
        %v438 = vxor.u32 %v182, 2147483648
        %v439 = vxor.u32 %v183, 2147483648
        %v440 = vxor.u32 %v184, 2147483648
        %v441 = vxor.u32 %v185, 2147483648
        %v442 = vxor.u32 %v186, 2147483648
        %v443 = vxor.u32 %v187, 2147483648
        %v444 = vxor.u32 %v188, 2147483648
        %v445 = vxor.u32 %v189, 2147483648
        %v446 = vxor.u32 %v190, 2147483648
        %v447 = vxor.u32 %v191, 2147483648
        %v448 = vxor.u32 %v192, 2147483648
        %v449 = vxor.u32 %v193, 2147483648
        %v450 = vxor.u32 %v194, 2147483648
        %v451 = vxor.u32 %v195, 2147483648
        %v452 = vxor.u32 %v196, 2147483648
        %v453 = vxor.u32 %v197, 2147483648
        %v454 = vxor.u32 %v198, 2147483648
        %v455 = vxor.u32 %v199, 2147483648
        %v456 = vxor.u32 %v200, 2147483648
        %v457 = vxor.u32 %v201, 2147483648
        %v458 = vxor.u32 %v202, 2147483648
        %v459 = vxor.u32 %v203, 2147483648
        %v460 = vxor.u32 %v204, 2147483648
        %v461 = vxor.u32 %v205, 2147483648
        %v462 = vxor.u32 %v206, 2147483648
        %v463 = vxor.u32 %v207, 2147483648
        %v464 = vxor.u32 %v208, 2147483648
        %v465 = vxor.u32 %v209, 2147483648
        %v466 = vxor.u32 %v210, 2147483648
        %v467 = vxor.u32 %v211, 2147483648
        %v468 = vxor.u32 %v212, 2147483648
        %v469 = vxor.u32 %v213, 2147483648
        %v470 = vxor.u32 %v214, 2147483648
        %v471 = vxor.u32 %v215, 2147483648
        %v472 = vxor.u32 %v216, 2147483648
        %v473 = vxor.u32 %v217, 2147483648
        %v474 = vxor.u32 %v218, 2147483648
        %v475 = vxor.u32 %v219, 2147483648
        %v476 = vxor.u32 %v220, 2147483648
        %v477 = vxor.u32 %v221, 2147483648
        %v478 = vxor.u32 %v222, 2147483648
        %v479 = vxor.u32 %v223, 2147483648
        %v480 = vxor.u32 %v224, 2147483648
        %v481 = vxor.u32 %v225, 2147483648
        %v482 = vxor.u32 %v226, 2147483648
        %v483 = vxor.u32 %v227, 2147483648
        %v484 = vxor.u32 %v228, 2147483648
        %v485 = vxor.u32 %v229, 2147483648
        %v486 = vxor.u32 %v230, 2147483648
        %v487 = vxor.u32 %v231, 2147483648
        %v488 = vxor.u32 %v232, 2147483648
        %v489 = vxor.u32 %v233, 2147483648
        %v490 = vxor.u32 %v234, 2147483648
        %v491 = vxor.u32 %v235, 2147483648
        %v492 = vxor.u32 %v236, 2147483648
        %v493 = vxor.u32 %v237, 2147483648
        %v494 = vxor.u32 %v238, 2147483648
        %v495 = vxor.u32 %v239, 2147483648
        %v496 = vxor.u32 %v240, 2147483648
        %v497 = vxor.u32 %v241, 2147483648
        %v498 = vxor.u32 %v242, 2147483648
        %v499 = vxor.u32 %v243, 2147483648
        %v500 = vxor.u32 %v244, 2147483648
        %v501 = vxor.u32 %v245, 2147483648
        %v502 = vxor.u32 %v246, 2147483648
        %v503 = vxor.u32 %v247, 2147483648
        %v504 = vxor.u32 %v248, 2147483648
        %v505 = vxor.u32 %v249, 2147483648
        %v506 = vxor.u32 %v250, 2147483648
        %v507 = vxor.u32 %v251, 2147483648
        %v508 = vxor.u32 %v252, 2147483648
        %v509 = vxor.u32 %v253, 2147483648
        %v510 = vxor.u32 %v254, 2147483648
        %v511 = vxor.u32 %v255, 2147483648
        %v512 = vxor.u32 %v256, 2147483648
        %v513 = vxor.u32 %v257, 2147483648
        %v514 = vxor.u32 %v258, 2147483648
        %v515 = vxor.u32 %v259, 2147483648
        %v516 = vxor.u32 %v260, 2147483648
        %v517 = vxor.u32 %v261, 2147483648
        %v518 = vxor.u32 %v262, 2147483648
        %v519 = vxor.u32 %v263, 2147483648
        %v520 = vxor.u32 %v264, 2147483648
        %v521 = vxor.u32 %v265, 2147483648
        %v522 = vxor.u32 %v266, 2147483648
        %v523 = vxor.u32 %v267, 2147483648
        %v524 = vxor.u32 %v268, 2147483648
        %v525 = vxor.u32 %v269, 2147483648
        %v526 = vxor.u32 %v270, 2147483648
        %v527 = vxor.u32 %v271, 2147483648
        %v528 = vxor.u32 %v272, 2147483648
        %v529 = vxor.u32 %v273, 2147483648
        %v530 = vxor.u32 %v274, 2147483648
        %v531 = vxor.u32 %v275, 2147483648
        %v532 = vxor.u32 %v276, 2147483648
        %v533 = vxor.u32 %v277, 2147483648
        %v534 = vxor.u32 %v278, 2147483648
        %v535 = vxor.u32 %v279, 2147483648
        %v536 = vxor.u32 %v280, 2147483648
        %v537 = vxor.u32 %v281, 2147483648
        %v538 = vxor.u32 %v282, 2147483648
        %v539 = vxor.u32 %v283, 2147483648
        %v540 = vxor.u32 %v284, 2147483648
        %v541 = vxor.u32 %v285, 2147483648
        %v542 = vxor.u32 %v286, 2147483648
        %v543 = vxor.u32 %v287, 2147483648
        %v544 = vxor.u32 %v288, 2147483648
        %v545 = vxor.u32 %v289, 2147483648
        %v546 = vxor.u32 %v290, 2147483648
        %v547 = vxor.u32 %v291, 2147483648
        %v548 = vxor.u32 %v292, 2147483648
        %v549 = vxor.u32 %v293, 2147483648
        %v550 = vxor.u32 %v294, 2147483648
        %v551 = vxor.u32 %v295, 2147483648
        %v552 = vxor.u32 %v296, 2147483648
        %v553 = vxor.u32 %v297, 2147483648
        %v554 = vxor.u32 %v298, 2147483648
        %v555 = vxor.u32 %v299, 2147483648
        %v556 = vxor.u32 %v300, 2147483648
        %v557 = vxor.u32 %v301, 2147483648
        %v558 = vxor.u32 %v302, 2147483648
        %v559 = vxor.u32 %v303, 2147483648
        %v560 = vxor.u32 %v304, 2147483648
        %v561 = vxor.u32 %v305, 2147483648
        %v562 = vxor.u32 %v306, 2147483648
        %v563 = vxor.u32 %v307, 2147483648
        %v564 = vxor.u32 %v308, 2147483648
        %v565 = vxor.u32 %v309, 2147483648
        %v566 = vxor.u32 %v310, 2147483648
        %v567 = vxor.u32 %v311, 2147483648
        %v568 = vxor.u32 %v312, 2147483648
        %v569 = vxor.u32 %v313, 2147483648
        %v570 = vxor.u32 %v314, 2147483648
        %v571 = vxor.u32 %v315, 2147483648
        %v572 = vxor.u32 %v316, 2147483648
        %v573 = vxor.u32 %v317, 2147483648
        %v574 = vxor.u32 %v318, 2147483648
        %v575 = vxor.u32 %v319, 2147483648
        %v576 = vxor.u32 %v320, 2147483648
        %v577 = vxor.u32 %v321, 2147483648
        %v578 = vxor.u32 %v322, 2147483648
        %v579 = vxor.u32 %v323, 2147483648
        %v580 = vxor.u32 %v324, 2147483648
        %v581 = vxor.u32 %v325, 2147483648
        %v582 = vxor.u32 %v326, 2147483648
        %v583 = vxor.u32 %v327, 2147483648
        %v584 = vxor.u32 %v328, 2147483648
        %v585 = vxor.u32 %v329, 2147483648
        %v586 = vxor.u32 %v330, 2147483648
        %v587 = vxor.u32 %v331, 2147483648
        %v588 = vxor.u32 %v332, 2147483648
        %v589 = vxor.u32 %v333, 2147483648
        %v590 = vxor.u32 %v334, 2147483648
        %v591 = vxor.u32 %v335, 2147483648
        %v592 = vxor.u32 %v336, 2147483648
        %v593 = vxor.u32 %v337, 2147483648
        %v594 = vxor.u32 %v338, 2147483648
        %v595 = vxor.u32 %v339, 2147483648
        %v596 = vxor.u32 %v340, 2147483648
        %v597 = vxor.u32 %v341, 2147483648
        %v598 = vxor.u32 %v342, 2147483648
        %v599 = vxor.u32 %v343, 2147483648
        %v600 = vxor.u32 %v344, 2147483648
        %v601 = vxor.u32 %v345, 2147483648
        %v602 = vxor.u32 %v346, 2147483648
        %v603 = vxor.u32 %v347, 2147483648
        %v604 = vxor.u32 %v348, 2147483648
        %v605 = vxor.u32 %v349, 2147483648
        %v606 = vxor.u32 %v350, 2147483648
        %v607 = vxor.u32 %v351, 2147483648
        %v608 = vxor.u32 %v352, 2147483648
        %v609 = vxor.u32 %v353, 2147483648
        %v610 = vxor.u32 %v354, 2147483648
        %v611 = vxor.u32 %v355, 2147483648
        %v612 = vxor.u32 %v356, 2147483648
        %v613 = vxor.u32 %v357, 2147483648
        %v614 = vxor.u32 %v358, 2147483648
        %v615 = vxor.u32 %v359, 2147483648
        %v616 = vxor.u32 %v360, 2147483648
        %v617 = vxor.u32 %v361, 2147483648
        %v618 = vxor.u32 %v362, 2147483648
        %v619 = vxor.u32 %v363, 2147483648
        %v620 = vxor.u32 %v364, 2147483648
        %v621 = vxor.u32 %v365, 2147483648
        %v622 = vxor.u32 %v366, 2147483648
        %v623 = vxor.u32 %v367, 2147483648
        %v624 = vxor.u32 %v368, 2147483648
        %v625 = vxor.u32 %v369, 2147483648
        %v626 = vxor.u32 %v370, 2147483648
        %v627 = vxor.u32 %v371, 2147483648
        %v628 = vxor.u32 %v372, 2147483648
        %v629 = vxor.u32 %v373, 2147483648
        %v630 = vxor.u32 %v374, 2147483648
        %v631 = vxor.u32 %v375, 2147483648
        %v632 = vxor.u32 %v376, 2147483648
        %v633 = vxor.u32 %v377, 2147483648
        %v634 = vxor.u32 %v378, 2147483648
        %v635 = vxor.u32 %v379, 2147483648
        %v636 = vxor.u32 %v380, 2147483648
        %v637 = vxor.u32 %v381, 2147483648
        %v638 = vxor.u32 %v382, 2147483648
        %v639 = vxor.u32 %v383, 2147483648
        %v640 = vxor.u32 %v384, 2147483648
        %v641 = vxor.u32 %v385, 2147483648
        %v642 = vxor.u32 %v386, 2147483648
        %v643 = vxor.u32 %v387, 2147483648
        %v644 = vxor.u32 %v388, 2147483648
        %v645 = vxor.u32 %v389, 2147483648
        %v646 = vxor.u32 %v390, 2147483648
        %v647 = vxor.u32 %v391, 2147483648
        %v648 = vxor.u32 %v392, 2147483648
        %v649 = vxor.u32 %v393, 2147483648
        %v650 = vmul.f32 %v394, 1.442695
        %v651 = vpow.pop %v650
        %v652 = vmul.f32 %v395, 1.442695
        %v653 = vpow.pop %v652
        %v654 = vmul.f32 %v396, 1.442695
        %v655 = vpow.pop %v654
        %v656 = vmul.f32 %v397, 1.442695
        %v657 = vpow.pop %v656
        %v658 = vmul.f32 %v398, 1.442695
        %v659 = vpow.pop %v658
        %v660 = vmul.f32 %v399, 1.442695
        %v661 = vpow.pop %v660
        %v662 = vmul.f32 %v400, 1.442695
        %v663 = vpow.pop %v662
        %v664 = vmul.f32 %v401, 1.442695
        %v665 = vpow.pop %v664
        %v666 = vmul.f32 %v402, 1.442695
        %v667 = vpow.pop %v666
        %v668 = vmul.f32 %v403, 1.442695
        %v669 = vpow.pop %v668
        %v670 = vmul.f32 %v404, 1.442695
        %v671 = vpow.pop %v670
        %v672 = vmul.f32 %v405, 1.442695
        %v673 = vpow.pop %v672
        %v674 = vmul.f32 %v406, 1.442695
        %v675 = vpow.pop %v674
        %v676 = vmul.f32 %v407, 1.442695
        %v677 = vpow.pop %v676
        %v678 = vmul.f32 %v408, 1.442695
        %v679 = vpow.pop %v678
        %v680 = vmul.f32 %v409, 1.442695
        %v681 = vpow.pop %v680
        %v682 = vmul.f32 %v410, 1.442695
        %v683 = vpow.pop %v682
        %v684 = vmul.f32 %v411, 1.442695
        %v685 = vpow.pop %v684
        %v686 = vmul.f32 %v412, 1.442695
        %v687 = vpow.pop %v686
        %v688 = vmul.f32 %v413, 1.442695
        %v689 = vpow.pop %v688
        %v690 = vmul.f32 %v414, 1.442695
        %v691 = vpow.pop %v690
        %v692 = vmul.f32 %v415, 1.442695
        %v693 = vpow.pop %v692
        %v694 = vmul.f32 %v416, 1.442695
        %v695 = vpow.pop %v694
        %v696 = vmul.f32 %v417, 1.442695
        %v697 = vpow.pop %v696
        %v698 = vmul.f32 %v418, 1.442695
        %v699 = vpow.pop %v698
        %v700 = vmul.f32 %v419, 1.442695
        %v701 = vpow.pop %v700
        %v702 = vmul.f32 %v420, 1.442695
        %v703 = vpow.pop %v702
        %v704 = vmul.f32 %v421, 1.442695
        %v705 = vpow.pop %v704
        %v706 = vmul.f32 %v422, 1.442695
        %v707 = vpow.pop %v706
        %v708 = vmul.f32 %v423, 1.442695
        %v709 = vpow.pop %v708
        %v710 = vmul.f32 %v424, 1.442695
        %v711 = vpow.pop %v710
        %v712 = vmul.f32 %v425, 1.442695
        %v713 = vpow.pop %v712
        %v714 = vmul.f32 %v426, 1.442695
        %v715 = vpow.pop %v714
        %v716 = vmul.f32 %v427, 1.442695
        %v717 = vpow.pop %v716
        %v718 = vmul.f32 %v428, 1.442695
        %v719 = vpow.pop %v718
        %v720 = vmul.f32 %v429, 1.442695
        %v721 = vpow.pop %v720
        %v722 = vmul.f32 %v430, 1.442695
        %v723 = vpow.pop %v722
        %v724 = vmul.f32 %v431, 1.442695
        %v725 = vpow.pop %v724
        %v726 = vmul.f32 %v432, 1.442695
        %v727 = vpow.pop %v726
        %v728 = vmul.f32 %v433, 1.442695
        %v729 = vpow.pop %v728
        %v730 = vmul.f32 %v434, 1.442695
        %v731 = vpow.pop %v730
        %v732 = vmul.f32 %v435, 1.442695
        %v733 = vpow.pop %v732
        %v734 = vmul.f32 %v436, 1.442695
        %v735 = vpow.pop %v734
        %v736 = vmul.f32 %v437, 1.442695
        %v737 = vpow.pop %v736
        %v738 = vmul.f32 %v438, 1.442695
        %v739 = vpow.pop %v738
        %v740 = vmul.f32 %v439, 1.442695
        %v741 = vpow.pop %v740
        %v742 = vmul.f32 %v440, 1.442695
        %v743 = vpow.pop %v742
        %v744 = vmul.f32 %v441, 1.442695
        %v745 = vpow.pop %v744
        %v746 = vmul.f32 %v442, 1.442695
        %v747 = vpow.pop %v746
        %v748 = vmul.f32 %v443, 1.442695
        %v749 = vpow.pop %v748
        %v750 = vmul.f32 %v444, 1.442695
        %v751 = vpow.pop %v750
        %v752 = vmul.f32 %v445, 1.442695
        %v753 = vpow.pop %v752
        %v754 = vmul.f32 %v446, 1.442695
        %v755 = vpow.pop %v754
        %v756 = vmul.f32 %v447, 1.442695
        %v757 = vpow.pop %v756
        %v758 = vmul.f32 %v448, 1.442695
        %v759 = vpow.pop %v758
        %v760 = vmul.f32 %v449, 1.442695
        %v761 = vpow.pop %v760
        %v762 = vmul.f32 %v450, 1.442695
        %v763 = vpow.pop %v762
        %v764 = vmul.f32 %v451, 1.442695
        %v765 = vpow.pop %v764
        %v766 = vmul.f32 %v452, 1.442695
        %v767 = vpow.pop %v766
        %v768 = vmul.f32 %v453, 1.442695
        %v769 = vpow.pop %v768
        %v770 = vmul.f32 %v454, 1.442695
        %v771 = vpow.pop %v770
        %v772 = vmul.f32 %v455, 1.442695
        %v773 = vpow.pop %v772
        %v774 = vmul.f32 %v456, 1.442695
        %v775 = vpow.pop %v774
        %v776 = vmul.f32 %v457, 1.442695
        %v777 = vpow.pop %v776
        %v778 = vmul.f32 %v458, 1.442695
        %v779 = vpow.pop %v778
        %v780 = vmul.f32 %v459, 1.442695
        %v781 = vpow.pop %v780
        %v782 = vmul.f32 %v460, 1.442695
        %v783 = vpow.pop %v782
        %v784 = vmul.f32 %v461, 1.442695
        %v785 = vpow.pop %v784
        %v786 = vmul.f32 %v462, 1.442695
        %v787 = vpow.pop %v786
        %v788 = vmul.f32 %v463, 1.442695
        %v789 = vpow.pop %v788
        %v790 = vmul.f32 %v464, 1.442695
        %v791 = vpow.pop %v790
        %v792 = vmul.f32 %v465, 1.442695
        %v793 = vpow.pop %v792
        %v794 = vmul.f32 %v466, 1.442695
        %v795 = vpow.pop %v794
        %v796 = vmul.f32 %v467, 1.442695
        %v797 = vpow.pop %v796
        %v798 = vmul.f32 %v468, 1.442695
        %v799 = vpow.pop %v798
        %v800 = vmul.f32 %v469, 1.442695
        %v801 = vpow.pop %v800
        %v802 = vmul.f32 %v470, 1.442695
        %v803 = vpow.pop %v802
        %v804 = vmul.f32 %v471, 1.442695
        %v805 = vpow.pop %v804
        %v806 = vmul.f32 %v472, 1.442695
        %v807 = vpow.pop %v806
        %v808 = vmul.f32 %v473, 1.442695
        %v809 = vpow.pop %v808
        %v810 = vmul.f32 %v474, 1.442695
        %v811 = vpow.pop %v810
        %v812 = vmul.f32 %v475, 1.442695
        %v813 = vpow.pop %v812
        %v814 = vmul.f32 %v476, 1.442695
        %v815 = vpow.pop %v814
        %v816 = vmul.f32 %v477, 1.442695
        %v817 = vpow.pop %v816
        %v818 = vmul.f32 %v478, 1.442695
        %v819 = vpow.pop %v818
        %v820 = vmul.f32 %v479, 1.442695
        %v821 = vpow.pop %v820
        %v822 = vmul.f32 %v480, 1.442695
        %v823 = vpow.pop %v822
        %v824 = vmul.f32 %v481, 1.442695
        %v825 = vpow.pop %v824
        %v826 = vmul.f32 %v482, 1.442695
        %v827 = vpow.pop %v826
        %v828 = vmul.f32 %v483, 1.442695
        %v829 = vpow.pop %v828
        %v830 = vmul.f32 %v484, 1.442695
        %v831 = vpow.pop %v830
        %v832 = vmul.f32 %v485, 1.442695
        %v833 = vpow.pop %v832
        %v834 = vmul.f32 %v486, 1.442695
        %v835 = vpow.pop %v834
        %v836 = vmul.f32 %v487, 1.442695
        %v837 = vpow.pop %v836
        %v838 = vmul.f32 %v488, 1.442695
        %v839 = vpow.pop %v838
        %v840 = vmul.f32 %v489, 1.442695
        %v841 = vpow.pop %v840
        %v842 = vmul.f32 %v490, 1.442695
        %v843 = vpow.pop %v842
        %v844 = vmul.f32 %v491, 1.442695
        %v845 = vpow.pop %v844
        %v846 = vmul.f32 %v492, 1.442695
        %v847 = vpow.pop %v846
        %v848 = vmul.f32 %v493, 1.442695
        %v849 = vpow.pop %v848
        %v850 = vmul.f32 %v494, 1.442695
        %v851 = vpow.pop %v850
        %v852 = vmul.f32 %v495, 1.442695
        %v853 = vpow.pop %v852
        %v854 = vmul.f32 %v496, 1.442695
        %v855 = vpow.pop %v854
        %v856 = vmul.f32 %v497, 1.442695
        %v857 = vpow.pop %v856
        %v858 = vmul.f32 %v498, 1.442695
        %v859 = vpow.pop %v858
        %v860 = vmul.f32 %v499, 1.442695
        %v861 = vpow.pop %v860
        %v862 = vmul.f32 %v500, 1.442695
        %v863 = vpow.pop %v862
        %v864 = vmul.f32 %v501, 1.442695
        %v865 = vpow.pop %v864
        %v866 = vmul.f32 %v502, 1.442695
        %v867 = vpow.pop %v866
        %v868 = vmul.f32 %v503, 1.442695
        %v869 = vpow.pop %v868
        %v870 = vmul.f32 %v504, 1.442695
        %v871 = vpow.pop %v870
        %v872 = vmul.f32 %v505, 1.442695
        %v873 = vpow.pop %v872
        %v874 = vmul.f32 %v506, 1.442695
        %v875 = vpow.pop %v874
        %v876 = vmul.f32 %v507, 1.442695
        %v877 = vpow.pop %v876
        %v878 = vmul.f32 %v508, 1.442695
        %v879 = vpow.pop %v878
        %v880 = vmul.f32 %v509, 1.442695
        %v881 = vpow.pop %v880
        %v882 = vmul.f32 %v510, 1.442695
        %v883 = vpow.pop %v882
        %v884 = vmul.f32 %v511, 1.442695
        %v885 = vpow.pop %v884
        %v886 = vmul.f32 %v512, 1.442695
        %v887 = vpow.pop %v886
        %v888 = vmul.f32 %v513, 1.442695
        %v889 = vpow.pop %v888
        %v890 = vmul.f32 %v514, 1.442695
        %v891 = vpow.pop %v890
        %v892 = vmul.f32 %v515, 1.442695
        %v893 = vpow.pop %v892
        %v894 = vmul.f32 %v516, 1.442695
        %v895 = vpow.pop %v894
        %v896 = vmul.f32 %v517, 1.442695
        %v897 = vpow.pop %v896
        %v898 = vmul.f32 %v518, 1.442695
        %v899 = vpow.pop %v898
        %v900 = vmul.f32 %v519, 1.442695
        %v901 = vpow.pop %v900
        %v902 = vmul.f32 %v520, 1.442695
        %v903 = vpow.pop %v902
        %v904 = vmul.f32 %v521, 1.442695
        %v905 = vpow.pop %v904
        %v906 = vmul.f32 %v522, 1.442695
        %v907 = vpow.pop %v906
        %v908 = vmul.f32 %v523, 1.442695
        %v909 = vpow.pop %v908
        %v910 = vmul.f32 %v524, 1.442695
        %v911 = vpow.pop %v910
        %v912 = vmul.f32 %v525, 1.442695
        %v913 = vpow.pop %v912
        %v914 = vmul.f32 %v526, 1.442695
        %v915 = vpow.pop %v914
        %v916 = vmul.f32 %v527, 1.442695
        %v917 = vpow.pop %v916
        %v918 = vmul.f32 %v528, 1.442695
        %v919 = vpow.pop %v918
        %v920 = vmul.f32 %v529, 1.442695
        %v921 = vpow.pop %v920
        %v922 = vmul.f32 %v530, 1.442695
        %v923 = vpow.pop %v922
        %v924 = vmul.f32 %v531, 1.442695
        %v925 = vpow.pop %v924
        %v926 = vmul.f32 %v532, 1.442695
        %v927 = vpow.pop %v926
        %v928 = vmul.f32 %v533, 1.442695
        %v929 = vpow.pop %v928
        %v930 = vmul.f32 %v534, 1.442695
        %v931 = vpow.pop %v930
        %v932 = vmul.f32 %v535, 1.442695
        %v933 = vpow.pop %v932
        %v934 = vmul.f32 %v536, 1.442695
        %v935 = vpow.pop %v934
        %v936 = vmul.f32 %v537, 1.442695
        %v937 = vpow.pop %v936
        %v938 = vmul.f32 %v538, 1.442695
        %v939 = vpow.pop %v938
        %v940 = vmul.f32 %v539, 1.442695
        %v941 = vpow.pop %v940
        %v942 = vmul.f32 %v540, 1.442695
        %v943 = vpow.pop %v942
        %v944 = vmul.f32 %v541, 1.442695
        %v945 = vpow.pop %v944
        %v946 = vmul.f32 %v542, 1.442695
        %v947 = vpow.pop %v946
        %v948 = vmul.f32 %v543, 1.442695
        %v949 = vpow.pop %v948
        %v950 = vmul.f32 %v544, 1.442695
        %v951 = vpow.pop %v950
        %v952 = vmul.f32 %v545, 1.442695
        %v953 = vpow.pop %v952
        %v954 = vmul.f32 %v546, 1.442695
        %v955 = vpow.pop %v954
        %v956 = vmul.f32 %v547, 1.442695
        %v957 = vpow.pop %v956
        %v958 = vmul.f32 %v548, 1.442695
        %v959 = vpow.pop %v958
        %v960 = vmul.f32 %v549, 1.442695
        %v961 = vpow.pop %v960
        %v962 = vmul.f32 %v550, 1.442695
        %v963 = vpow.pop %v962
        %v964 = vmul.f32 %v551, 1.442695
        %v965 = vpow.pop %v964
        %v966 = vmul.f32 %v552, 1.442695
        %v967 = vpow.pop %v966
        %v968 = vmul.f32 %v553, 1.442695
        %v969 = vpow.pop %v968
        %v970 = vmul.f32 %v554, 1.442695
        %v971 = vpow.pop %v970
        %v972 = vmul.f32 %v555, 1.442695
        %v973 = vpow.pop %v972
        %v974 = vmul.f32 %v556, 1.442695
        %v975 = vpow.pop %v974
        %v976 = vmul.f32 %v557, 1.442695
        %v977 = vpow.pop %v976
        %v978 = vmul.f32 %v558, 1.442695
        %v979 = vpow.pop %v978
        %v980 = vmul.f32 %v559, 1.442695
        %v981 = vpow.pop %v980
        %v982 = vmul.f32 %v560, 1.442695
        %v983 = vpow.pop %v982
        %v984 = vmul.f32 %v561, 1.442695
        %v985 = vpow.pop %v984
        %v986 = vmul.f32 %v562, 1.442695
        %v987 = vpow.pop %v986
        %v988 = vmul.f32 %v563, 1.442695
        %v989 = vpow.pop %v988
        %v990 = vmul.f32 %v564, 1.442695
        %v991 = vpow.pop %v990
        %v992 = vmul.f32 %v565, 1.442695
        %v993 = vpow.pop %v992
        %v994 = vmul.f32 %v566, 1.442695
        %v995 = vpow.pop %v994
        %v996 = vmul.f32 %v567, 1.442695
        %v997 = vpow.pop %v996
        %v998 = vmul.f32 %v568, 1.442695
        %v999 = vpow.pop %v998
        %v1000 = vmul.f32 %v569, 1.442695
        %v1001 = vpow.pop %v1000
        %v1002 = vmul.f32 %v570, 1.442695
        %v1003 = vpow.pop %v1002
        %v1004 = vmul.f32 %v571, 1.442695
        %v1005 = vpow.pop %v1004
        %v1006 = vmul.f32 %v572, 1.442695
        %v1007 = vpow.pop %v1006
        %v1008 = vmul.f32 %v573, 1.442695
        %v1009 = vpow.pop %v1008
        %v1010 = vmul.f32 %v574, 1.442695
        %v1011 = vpow.pop %v1010
        %v1012 = vmul.f32 %v575, 1.442695
        %v1013 = vpow.pop %v1012
        %v1014 = vmul.f32 %v576, 1.442695
        %v1015 = vpow.pop %v1014
        %v1016 = vmul.f32 %v577, 1.442695
        %v1017 = vpow.pop %v1016
        %v1018 = vmul.f32 %v578, 1.442695
        %v1019 = vpow.pop %v1018
        %v1020 = vmul.f32 %v579, 1.442695
        %v1021 = vpow.pop %v1020
        %v1022 = vmul.f32 %v580, 1.442695
        %v1023 = vpow.pop %v1022
        %v1024 = vmul.f32 %v581, 1.442695
        %v1025 = vpow.pop %v1024
        %v1026 = vmul.f32 %v582, 1.442695
        %v1027 = vpow.pop %v1026
        %v1028 = vmul.f32 %v583, 1.442695
        %v1029 = vpow.pop %v1028
        %v1030 = vmul.f32 %v584, 1.442695
        %v1031 = vpow.pop %v1030
        %v1032 = vmul.f32 %v585, 1.442695
        %v1033 = vpow.pop %v1032
        %v1034 = vmul.f32 %v586, 1.442695
        %v1035 = vpow.pop %v1034
        %v1036 = vmul.f32 %v587, 1.442695
        %v1037 = vpow.pop %v1036
        %v1038 = vmul.f32 %v588, 1.442695
        %v1039 = vpow.pop %v1038
        %v1040 = vmul.f32 %v589, 1.442695
        %v1041 = vpow.pop %v1040
        %v1042 = vmul.f32 %v590, 1.442695
        %v1043 = vpow.pop %v1042
        %v1044 = vmul.f32 %v591, 1.442695
        %v1045 = vpow.pop %v1044
        %v1046 = vmul.f32 %v592, 1.442695
        %v1047 = vpow.pop %v1046
        %v1048 = vmul.f32 %v593, 1.442695
        %v1049 = vpow.pop %v1048
        %v1050 = vmul.f32 %v594, 1.442695
        %v1051 = vpow.pop %v1050
        %v1052 = vmul.f32 %v595, 1.442695
        %v1053 = vpow.pop %v1052
        %v1054 = vmul.f32 %v596, 1.442695
        %v1055 = vpow.pop %v1054
        %v1056 = vmul.f32 %v597, 1.442695
        %v1057 = vpow.pop %v1056
        %v1058 = vmul.f32 %v598, 1.442695
        %v1059 = vpow.pop %v1058
        %v1060 = vmul.f32 %v599, 1.442695
        %v1061 = vpow.pop %v1060
        %v1062 = vmul.f32 %v600, 1.442695
        %v1063 = vpow.pop %v1062
        %v1064 = vmul.f32 %v601, 1.442695
        %v1065 = vpow.pop %v1064
        %v1066 = vmul.f32 %v602, 1.442695
        %v1067 = vpow.pop %v1066
        %v1068 = vmul.f32 %v603, 1.442695
        %v1069 = vpow.pop %v1068
        %v1070 = vmul.f32 %v604, 1.442695
        %v1071 = vpow.pop %v1070
        %v1072 = vmul.f32 %v605, 1.442695
        %v1073 = vpow.pop %v1072
        %v1074 = vmul.f32 %v606, 1.442695
        %v1075 = vpow.pop %v1074
        %v1076 = vmul.f32 %v607, 1.442695
        %v1077 = vpow.pop %v1076
        %v1078 = vmul.f32 %v608, 1.442695
        %v1079 = vpow.pop %v1078
        %v1080 = vmul.f32 %v609, 1.442695
        %v1081 = vpow.pop %v1080
        %v1082 = vmul.f32 %v610, 1.442695
        %v1083 = vpow.pop %v1082
        %v1084 = vmul.f32 %v611, 1.442695
        %v1085 = vpow.pop %v1084
        %v1086 = vmul.f32 %v612, 1.442695
        %v1087 = vpow.pop %v1086
        %v1088 = vmul.f32 %v613, 1.442695
        %v1089 = vpow.pop %v1088
        %v1090 = vmul.f32 %v614, 1.442695
        %v1091 = vpow.pop %v1090
        %v1092 = vmul.f32 %v615, 1.442695
        %v1093 = vpow.pop %v1092
        %v1094 = vmul.f32 %v616, 1.442695
        %v1095 = vpow.pop %v1094
        %v1096 = vmul.f32 %v617, 1.442695
        %v1097 = vpow.pop %v1096
        %v1098 = vmul.f32 %v618, 1.442695
        %v1099 = vpow.pop %v1098
        %v1100 = vmul.f32 %v619, 1.442695
        %v1101 = vpow.pop %v1100
        %v1102 = vmul.f32 %v620, 1.442695
        %v1103 = vpow.pop %v1102
        %v1104 = vmul.f32 %v621, 1.442695
        %v1105 = vpow.pop %v1104
        %v1106 = vmul.f32 %v622, 1.442695
        %v1107 = vpow.pop %v1106
        %v1108 = vmul.f32 %v623, 1.442695
        %v1109 = vpow.pop %v1108
        %v1110 = vmul.f32 %v624, 1.442695
        %v1111 = vpow.pop %v1110
        %v1112 = vmul.f32 %v625, 1.442695
        %v1113 = vpow.pop %v1112
        %v1114 = vmul.f32 %v626, 1.442695
        %v1115 = vpow.pop %v1114
        %v1116 = vmul.f32 %v627, 1.442695
        %v1117 = vpow.pop %v1116
        %v1118 = vmul.f32 %v628, 1.442695
        %v1119 = vpow.pop %v1118
        %v1120 = vmul.f32 %v629, 1.442695
        %v1121 = vpow.pop %v1120
        %v1122 = vmul.f32 %v630, 1.442695
        %v1123 = vpow.pop %v1122
        %v1124 = vmul.f32 %v631, 1.442695
        %v1125 = vpow.pop %v1124
        %v1126 = vmul.f32 %v632, 1.442695
        %v1127 = vpow.pop %v1126
        %v1128 = vmul.f32 %v633, 1.442695
        %v1129 = vpow.pop %v1128
        %v1130 = vmul.f32 %v634, 1.442695
        %v1131 = vpow.pop %v1130
        %v1132 = vmul.f32 %v635, 1.442695
        %v1133 = vpow.pop %v1132
        %v1134 = vmul.f32 %v636, 1.442695
        %v1135 = vpow.pop %v1134
        %v1136 = vmul.f32 %v637, 1.442695
        %v1137 = vpow.pop %v1136
        %v1138 = vmul.f32 %v638, 1.442695
        %v1139 = vpow.pop %v1138
        %v1140 = vmul.f32 %v639, 1.442695
        %v1141 = vpow.pop %v1140
        %v1142 = vmul.f32 %v640, 1.442695
        %v1143 = vpow.pop %v1142
        %v1144 = vmul.f32 %v641, 1.442695
        %v1145 = vpow.pop %v1144
        %v1146 = vmul.f32 %v642, 1.442695
        %v1147 = vpow.pop %v1146
        %v1148 = vmul.f32 %v643, 1.442695
        %v1149 = vpow.pop %v1148
        %v1150 = vmul.f32 %v644, 1.442695
        %v1151 = vpow.pop %v1150
        %v1152 = vmul.f32 %v645, 1.442695
        %v1153 = vpow.pop %v1152
        %v1154 = vmul.f32 %v646, 1.442695
        %v1155 = vpow.pop %v1154
        %v1156 = vmul.f32 %v647, 1.442695
        %v1157 = vpow.pop %v1156
        %v1158 = vmul.f32 %v648, 1.442695
        %v1159 = vpow.pop %v1158
        %v1160 = vmul.f32 %v649, 1.442695
        %v1161 = vpow.pop %v1160
        %v1162 = vadd.f32 %v651, 1.0
        %v1163 = vadd.f32 %v653, 1.0
        %v1164 = vadd.f32 %v655, 1.0
        %v1165 = vadd.f32 %v657, 1.0
        %v1166 = vadd.f32 %v659, 1.0
        %v1167 = vadd.f32 %v661, 1.0
        %v1168 = vadd.f32 %v663, 1.0
        %v1169 = vadd.f32 %v665, 1.0
        %v1170 = vadd.f32 %v667, 1.0
        %v1171 = vadd.f32 %v669, 1.0
        %v1172 = vadd.f32 %v671, 1.0
        %v1173 = vadd.f32 %v673, 1.0
        %v1174 = vadd.f32 %v675, 1.0
        %v1175 = vadd.f32 %v677, 1.0
        %v1176 = vadd.f32 %v679, 1.0
        %v1177 = vadd.f32 %v681, 1.0
        %v1178 = vadd.f32 %v683, 1.0
        %v1179 = vadd.f32 %v685, 1.0
        %v1180 = vadd.f32 %v687, 1.0
        %v1181 = vadd.f32 %v689, 1.0
        %v1182 = vadd.f32 %v691, 1.0
        %v1183 = vadd.f32 %v693, 1.0
        %v1184 = vadd.f32 %v695, 1.0
        %v1185 = vadd.f32 %v697, 1.0
        %v1186 = vadd.f32 %v699, 1.0
        %v1187 = vadd.f32 %v701, 1.0
        %v1188 = vadd.f32 %v703, 1.0
        %v1189 = vadd.f32 %v705, 1.0
        %v1190 = vadd.f32 %v707, 1.0
        %v1191 = vadd.f32 %v709, 1.0
        %v1192 = vadd.f32 %v711, 1.0
        %v1193 = vadd.f32 %v713, 1.0
        %v1194 = vadd.f32 %v715, 1.0
        %v1195 = vadd.f32 %v717, 1.0
        %v1196 = vadd.f32 %v719, 1.0
        %v1197 = vadd.f32 %v721, 1.0
        %v1198 = vadd.f32 %v723, 1.0
        %v1199 = vadd.f32 %v725, 1.0
        %v1200 = vadd.f32 %v727, 1.0
        %v1201 = vadd.f32 %v729, 1.0
        %v1202 = vadd.f32 %v731, 1.0
        %v1203 = vadd.f32 %v733, 1.0
        %v1204 = vadd.f32 %v735, 1.0
        %v1205 = vadd.f32 %v737, 1.0
        %v1206 = vadd.f32 %v739, 1.0
        %v1207 = vadd.f32 %v741, 1.0
        %v1208 = vadd.f32 %v743, 1.0
        %v1209 = vadd.f32 %v745, 1.0
        %v1210 = vadd.f32 %v747, 1.0
        %v1211 = vadd.f32 %v749, 1.0
        %v1212 = vadd.f32 %v751, 1.0
        %v1213 = vadd.f32 %v753, 1.0
        %v1214 = vadd.f32 %v755, 1.0
        %v1215 = vadd.f32 %v757, 1.0
        %v1216 = vadd.f32 %v759, 1.0
        %v1217 = vadd.f32 %v761, 1.0
        %v1218 = vadd.f32 %v763, 1.0
        %v1219 = vadd.f32 %v765, 1.0
        %v1220 = vadd.f32 %v767, 1.0
        %v1221 = vadd.f32 %v769, 1.0
        %v1222 = vadd.f32 %v771, 1.0
        %v1223 = vadd.f32 %v773, 1.0
        %v1224 = vadd.f32 %v775, 1.0
        %v1225 = vadd.f32 %v777, 1.0
        %v1226 = vadd.f32 %v779, 1.0
        %v1227 = vadd.f32 %v781, 1.0
        %v1228 = vadd.f32 %v783, 1.0
        %v1229 = vadd.f32 %v785, 1.0
        %v1230 = vadd.f32 %v787, 1.0
        %v1231 = vadd.f32 %v789, 1.0
        %v1232 = vadd.f32 %v791, 1.0
        %v1233 = vadd.f32 %v793, 1.0
        %v1234 = vadd.f32 %v795, 1.0
        %v1235 = vadd.f32 %v797, 1.0
        %v1236 = vadd.f32 %v799, 1.0
        %v1237 = vadd.f32 %v801, 1.0
        %v1238 = vadd.f32 %v803, 1.0
        %v1239 = vadd.f32 %v805, 1.0
        %v1240 = vadd.f32 %v807, 1.0
        %v1241 = vadd.f32 %v809, 1.0
        %v1242 = vadd.f32 %v811, 1.0
        %v1243 = vadd.f32 %v813, 1.0
        %v1244 = vadd.f32 %v815, 1.0
        %v1245 = vadd.f32 %v817, 1.0
        %v1246 = vadd.f32 %v819, 1.0
        %v1247 = vadd.f32 %v821, 1.0
        %v1248 = vadd.f32 %v823, 1.0
        %v1249 = vadd.f32 %v825, 1.0
        %v1250 = vadd.f32 %v827, 1.0
        %v1251 = vadd.f32 %v829, 1.0
        %v1252 = vadd.f32 %v831, 1.0
        %v1253 = vadd.f32 %v833, 1.0
        %v1254 = vadd.f32 %v835, 1.0
        %v1255 = vadd.f32 %v837, 1.0
        %v1256 = vadd.f32 %v839, 1.0
        %v1257 = vadd.f32 %v841, 1.0
        %v1258 = vadd.f32 %v843, 1.0
        %v1259 = vadd.f32 %v845, 1.0
        %v1260 = vadd.f32 %v847, 1.0
        %v1261 = vadd.f32 %v849, 1.0
        %v1262 = vadd.f32 %v851, 1.0
        %v1263 = vadd.f32 %v853, 1.0
        %v1264 = vadd.f32 %v855, 1.0
        %v1265 = vadd.f32 %v857, 1.0
        %v1266 = vadd.f32 %v859, 1.0
        %v1267 = vadd.f32 %v861, 1.0
        %v1268 = vadd.f32 %v863, 1.0
        %v1269 = vadd.f32 %v865, 1.0
        %v1270 = vadd.f32 %v867, 1.0
        %v1271 = vadd.f32 %v869, 1.0
        %v1272 = vadd.f32 %v871, 1.0
        %v1273 = vadd.f32 %v873, 1.0
        %v1274 = vadd.f32 %v875, 1.0
        %v1275 = vadd.f32 %v877, 1.0
        %v1276 = vadd.f32 %v879, 1.0
        %v1277 = vadd.f32 %v881, 1.0
        %v1278 = vadd.f32 %v883, 1.0
        %v1279 = vadd.f32 %v885, 1.0
        %v1280 = vadd.f32 %v887, 1.0
        %v1281 = vadd.f32 %v889, 1.0
        %v1282 = vadd.f32 %v891, 1.0
        %v1283 = vadd.f32 %v893, 1.0
        %v1284 = vadd.f32 %v895, 1.0
        %v1285 = vadd.f32 %v897, 1.0
        %v1286 = vadd.f32 %v899, 1.0
        %v1287 = vadd.f32 %v901, 1.0
        %v1288 = vadd.f32 %v903, 1.0
        %v1289 = vadd.f32 %v905, 1.0
        %v1290 = vadd.f32 %v907, 1.0
        %v1291 = vadd.f32 %v909, 1.0
        %v1292 = vadd.f32 %v911, 1.0
        %v1293 = vadd.f32 %v913, 1.0
        %v1294 = vadd.f32 %v915, 1.0
        %v1295 = vadd.f32 %v917, 1.0
        %v1296 = vadd.f32 %v919, 1.0
        %v1297 = vadd.f32 %v921, 1.0
        %v1298 = vadd.f32 %v923, 1.0
        %v1299 = vadd.f32 %v925, 1.0
        %v1300 = vadd.f32 %v927, 1.0
        %v1301 = vadd.f32 %v929, 1.0
        %v1302 = vadd.f32 %v931, 1.0
        %v1303 = vadd.f32 %v933, 1.0
        %v1304 = vadd.f32 %v935, 1.0
        %v1305 = vadd.f32 %v937, 1.0
        %v1306 = vadd.f32 %v939, 1.0
        %v1307 = vadd.f32 %v941, 1.0
        %v1308 = vadd.f32 %v943, 1.0
        %v1309 = vadd.f32 %v945, 1.0
        %v1310 = vadd.f32 %v947, 1.0
        %v1311 = vadd.f32 %v949, 1.0
        %v1312 = vadd.f32 %v951, 1.0
        %v1313 = vadd.f32 %v953, 1.0
        %v1314 = vadd.f32 %v955, 1.0
        %v1315 = vadd.f32 %v957, 1.0
        %v1316 = vadd.f32 %v959, 1.0
        %v1317 = vadd.f32 %v961, 1.0
        %v1318 = vadd.f32 %v963, 1.0
        %v1319 = vadd.f32 %v965, 1.0
        %v1320 = vadd.f32 %v967, 1.0
        %v1321 = vadd.f32 %v969, 1.0
        %v1322 = vadd.f32 %v971, 1.0
        %v1323 = vadd.f32 %v973, 1.0
        %v1324 = vadd.f32 %v975, 1.0
        %v1325 = vadd.f32 %v977, 1.0
        %v1326 = vadd.f32 %v979, 1.0
        %v1327 = vadd.f32 %v981, 1.0
        %v1328 = vadd.f32 %v983, 1.0
        %v1329 = vadd.f32 %v985, 1.0
        %v1330 = vadd.f32 %v987, 1.0
        %v1331 = vadd.f32 %v989, 1.0
        %v1332 = vadd.f32 %v991, 1.0
        %v1333 = vadd.f32 %v993, 1.0
        %v1334 = vadd.f32 %v995, 1.0
        %v1335 = vadd.f32 %v997, 1.0
        %v1336 = vadd.f32 %v999, 1.0
        %v1337 = vadd.f32 %v1001, 1.0
        %v1338 = vadd.f32 %v1003, 1.0
        %v1339 = vadd.f32 %v1005, 1.0
        %v1340 = vadd.f32 %v1007, 1.0
        %v1341 = vadd.f32 %v1009, 1.0
        %v1342 = vadd.f32 %v1011, 1.0
        %v1343 = vadd.f32 %v1013, 1.0
        %v1344 = vadd.f32 %v1015, 1.0
        %v1345 = vadd.f32 %v1017, 1.0
        %v1346 = vadd.f32 %v1019, 1.0
        %v1347 = vadd.f32 %v1021, 1.0
        %v1348 = vadd.f32 %v1023, 1.0
        %v1349 = vadd.f32 %v1025, 1.0
        %v1350 = vadd.f32 %v1027, 1.0
        %v1351 = vadd.f32 %v1029, 1.0
        %v1352 = vadd.f32 %v1031, 1.0
        %v1353 = vadd.f32 %v1033, 1.0
        %v1354 = vadd.f32 %v1035, 1.0
        %v1355 = vadd.f32 %v1037, 1.0
        %v1356 = vadd.f32 %v1039, 1.0
        %v1357 = vadd.f32 %v1041, 1.0
        %v1358 = vadd.f32 %v1043, 1.0
        %v1359 = vadd.f32 %v1045, 1.0
        %v1360 = vadd.f32 %v1047, 1.0
        %v1361 = vadd.f32 %v1049, 1.0
        %v1362 = vadd.f32 %v1051, 1.0
        %v1363 = vadd.f32 %v1053, 1.0
        %v1364 = vadd.f32 %v1055, 1.0
        %v1365 = vadd.f32 %v1057, 1.0
        %v1366 = vadd.f32 %v1059, 1.0
        %v1367 = vadd.f32 %v1061, 1.0
        %v1368 = vadd.f32 %v1063, 1.0
        %v1369 = vadd.f32 %v1065, 1.0
        %v1370 = vadd.f32 %v1067, 1.0
        %v1371 = vadd.f32 %v1069, 1.0
        %v1372 = vadd.f32 %v1071, 1.0
        %v1373 = vadd.f32 %v1073, 1.0
        %v1374 = vadd.f32 %v1075, 1.0
        %v1375 = vadd.f32 %v1077, 1.0
        %v1376 = vadd.f32 %v1079, 1.0
        %v1377 = vadd.f32 %v1081, 1.0
        %v1378 = vadd.f32 %v1083, 1.0
        %v1379 = vadd.f32 %v1085, 1.0
        %v1380 = vadd.f32 %v1087, 1.0
        %v1381 = vadd.f32 %v1089, 1.0
        %v1382 = vadd.f32 %v1091, 1.0
        %v1383 = vadd.f32 %v1093, 1.0
        %v1384 = vadd.f32 %v1095, 1.0
        %v1385 = vadd.f32 %v1097, 1.0
        %v1386 = vadd.f32 %v1099, 1.0
        %v1387 = vadd.f32 %v1101, 1.0
        %v1388 = vadd.f32 %v1103, 1.0
        %v1389 = vadd.f32 %v1105, 1.0
        %v1390 = vadd.f32 %v1107, 1.0
        %v1391 = vadd.f32 %v1109, 1.0
        %v1392 = vadd.f32 %v1111, 1.0
        %v1393 = vadd.f32 %v1113, 1.0
        %v1394 = vadd.f32 %v1115, 1.0
        %v1395 = vadd.f32 %v1117, 1.0
        %v1396 = vadd.f32 %v1119, 1.0
        %v1397 = vadd.f32 %v1121, 1.0
        %v1398 = vadd.f32 %v1123, 1.0
        %v1399 = vadd.f32 %v1125, 1.0
        %v1400 = vadd.f32 %v1127, 1.0
        %v1401 = vadd.f32 %v1129, 1.0
        %v1402 = vadd.f32 %v1131, 1.0
        %v1403 = vadd.f32 %v1133, 1.0
        %v1404 = vadd.f32 %v1135, 1.0
        %v1405 = vadd.f32 %v1137, 1.0
        %v1406 = vadd.f32 %v1139, 1.0
        %v1407 = vadd.f32 %v1141, 1.0
        %v1408 = vadd.f32 %v1143, 1.0
        %v1409 = vadd.f32 %v1145, 1.0
        %v1410 = vadd.f32 %v1147, 1.0
        %v1411 = vadd.f32 %v1149, 1.0
        %v1412 = vadd.f32 %v1151, 1.0
        %v1413 = vadd.f32 %v1153, 1.0
        %v1414 = vadd.f32 %v1155, 1.0
        %v1415 = vadd.f32 %v1157, 1.0
        %v1416 = vadd.f32 %v1159, 1.0
        %v1417 = vadd.f32 %v1161, 1.0
        %v1418 = vrcp.pop %v1162
        %v1419 = vmul.f32 1.0, %v1418
        %v1420 = vrcp.pop %v1163
        %v1421 = vmul.f32 1.0, %v1420
        %v1422 = vrcp.pop %v1164
        %v1423 = vmul.f32 1.0, %v1422
        %v1424 = vrcp.pop %v1165
        %v1425 = vmul.f32 1.0, %v1424
        %v1426 = vrcp.pop %v1166
        %v1427 = vmul.f32 1.0, %v1426
        %v1428 = vrcp.pop %v1167
        %v1429 = vmul.f32 1.0, %v1428
        %v1430 = vrcp.pop %v1168
        %v1431 = vmul.f32 1.0, %v1430
        %v1432 = vrcp.pop %v1169
        %v1433 = vmul.f32 1.0, %v1432
        %v1434 = vrcp.pop %v1170
        %v1435 = vmul.f32 1.0, %v1434
        %v1436 = vrcp.pop %v1171
        %v1437 = vmul.f32 1.0, %v1436
        %v1438 = vrcp.pop %v1172
        %v1439 = vmul.f32 1.0, %v1438
        %v1440 = vrcp.pop %v1173
        %v1441 = vmul.f32 1.0, %v1440
        %v1442 = vrcp.pop %v1174
        %v1443 = vmul.f32 1.0, %v1442
        %v1444 = vrcp.pop %v1175
        %v1445 = vmul.f32 1.0, %v1444
        %v1446 = vrcp.pop %v1176
        %v1447 = vmul.f32 1.0, %v1446
        %v1448 = vrcp.pop %v1177
        %v1449 = vmul.f32 1.0, %v1448
        %v1450 = vrcp.pop %v1178
        %v1451 = vmul.f32 1.0, %v1450
        %v1452 = vrcp.pop %v1179
        %v1453 = vmul.f32 1.0, %v1452
        %v1454 = vrcp.pop %v1180
        %v1455 = vmul.f32 1.0, %v1454
        %v1456 = vrcp.pop %v1181
        %v1457 = vmul.f32 1.0, %v1456
        %v1458 = vrcp.pop %v1182
        %v1459 = vmul.f32 1.0, %v1458
        %v1460 = vrcp.pop %v1183
        %v1461 = vmul.f32 1.0, %v1460
        %v1462 = vrcp.pop %v1184
        %v1463 = vmul.f32 1.0, %v1462
        %v1464 = vrcp.pop %v1185
        %v1465 = vmul.f32 1.0, %v1464
        %v1466 = vrcp.pop %v1186
        %v1467 = vmul.f32 1.0, %v1466
        %v1468 = vrcp.pop %v1187
        %v1469 = vmul.f32 1.0, %v1468
        %v1470 = vrcp.pop %v1188
        %v1471 = vmul.f32 1.0, %v1470
        %v1472 = vrcp.pop %v1189
        %v1473 = vmul.f32 1.0, %v1472
        %v1474 = vrcp.pop %v1190
        %v1475 = vmul.f32 1.0, %v1474
        %v1476 = vrcp.pop %v1191
        %v1477 = vmul.f32 1.0, %v1476
        %v1478 = vrcp.pop %v1192
        %v1479 = vmul.f32 1.0, %v1478
        %v1480 = vrcp.pop %v1193
        %v1481 = vmul.f32 1.0, %v1480
        %v1482 = vrcp.pop %v1194
        %v1483 = vmul.f32 1.0, %v1482
        %v1484 = vrcp.pop %v1195
        %v1485 = vmul.f32 1.0, %v1484
        %v1486 = vrcp.pop %v1196
        %v1487 = vmul.f32 1.0, %v1486
        %v1488 = vrcp.pop %v1197
        %v1489 = vmul.f32 1.0, %v1488
        %v1490 = vrcp.pop %v1198
        %v1491 = vmul.f32 1.0, %v1490
        %v1492 = vrcp.pop %v1199
        %v1493 = vmul.f32 1.0, %v1492
        %v1494 = vrcp.pop %v1200
        %v1495 = vmul.f32 1.0, %v1494
        %v1496 = vrcp.pop %v1201
        %v1497 = vmul.f32 1.0, %v1496
        %v1498 = vrcp.pop %v1202
        %v1499 = vmul.f32 1.0, %v1498
        %v1500 = vrcp.pop %v1203
        %v1501 = vmul.f32 1.0, %v1500
        %v1502 = vrcp.pop %v1204
        %v1503 = vmul.f32 1.0, %v1502
        %v1504 = vrcp.pop %v1205
        %v1505 = vmul.f32 1.0, %v1504
        %v1506 = vrcp.pop %v1206
        %v1507 = vmul.f32 1.0, %v1506
        %v1508 = vrcp.pop %v1207
        %v1509 = vmul.f32 1.0, %v1508
        %v1510 = vrcp.pop %v1208
        %v1511 = vmul.f32 1.0, %v1510
        %v1512 = vrcp.pop %v1209
        %v1513 = vmul.f32 1.0, %v1512
        %v1514 = vrcp.pop %v1210
        %v1515 = vmul.f32 1.0, %v1514
        %v1516 = vrcp.pop %v1211
        %v1517 = vmul.f32 1.0, %v1516
        %v1518 = vrcp.pop %v1212
        %v1519 = vmul.f32 1.0, %v1518
        %v1520 = vrcp.pop %v1213
        %v1521 = vmul.f32 1.0, %v1520
        %v1522 = vrcp.pop %v1214
        %v1523 = vmul.f32 1.0, %v1522
        %v1524 = vrcp.pop %v1215
        %v1525 = vmul.f32 1.0, %v1524
        %v1526 = vrcp.pop %v1216
        %v1527 = vmul.f32 1.0, %v1526
        %v1528 = vrcp.pop %v1217
        %v1529 = vmul.f32 1.0, %v1528
        %v1530 = vrcp.pop %v1218
        %v1531 = vmul.f32 1.0, %v1530
        %v1532 = vrcp.pop %v1219
        %v1533 = vmul.f32 1.0, %v1532
        %v1534 = vrcp.pop %v1220
        %v1535 = vmul.f32 1.0, %v1534
        %v1536 = vrcp.pop %v1221
        %v1537 = vmul.f32 1.0, %v1536
        %v1538 = vrcp.pop %v1222
        %v1539 = vmul.f32 1.0, %v1538
        %v1540 = vrcp.pop %v1223
        %v1541 = vmul.f32 1.0, %v1540
        %v1542 = vrcp.pop %v1224
        %v1543 = vmul.f32 1.0, %v1542
        %v1544 = vrcp.pop %v1225
        %v1545 = vmul.f32 1.0, %v1544
        %v1546 = vrcp.pop %v1226
        %v1547 = vmul.f32 1.0, %v1546
        %v1548 = vrcp.pop %v1227
        %v1549 = vmul.f32 1.0, %v1548
        %v1550 = vrcp.pop %v1228
        %v1551 = vmul.f32 1.0, %v1550
        %v1552 = vrcp.pop %v1229
        %v1553 = vmul.f32 1.0, %v1552
        %v1554 = vrcp.pop %v1230
        %v1555 = vmul.f32 1.0, %v1554
        %v1556 = vrcp.pop %v1231
        %v1557 = vmul.f32 1.0, %v1556
        %v1558 = vrcp.pop %v1232
        %v1559 = vmul.f32 1.0, %v1558
        %v1560 = vrcp.pop %v1233
        %v1561 = vmul.f32 1.0, %v1560
        %v1562 = vrcp.pop %v1234
        %v1563 = vmul.f32 1.0, %v1562
        %v1564 = vrcp.pop %v1235
        %v1565 = vmul.f32 1.0, %v1564
        %v1566 = vrcp.pop %v1236
        %v1567 = vmul.f32 1.0, %v1566
        %v1568 = vrcp.pop %v1237
        %v1569 = vmul.f32 1.0, %v1568
        %v1570 = vrcp.pop %v1238
        %v1571 = vmul.f32 1.0, %v1570
        %v1572 = vrcp.pop %v1239
        %v1573 = vmul.f32 1.0, %v1572
        %v1574 = vrcp.pop %v1240
        %v1575 = vmul.f32 1.0, %v1574
        %v1576 = vrcp.pop %v1241
        %v1577 = vmul.f32 1.0, %v1576
        %v1578 = vrcp.pop %v1242
        %v1579 = vmul.f32 1.0, %v1578
        %v1580 = vrcp.pop %v1243
        %v1581 = vmul.f32 1.0, %v1580
        %v1582 = vrcp.pop %v1244
        %v1583 = vmul.f32 1.0, %v1582
        %v1584 = vrcp.pop %v1245
        %v1585 = vmul.f32 1.0, %v1584
        %v1586 = vrcp.pop %v1246
        %v1587 = vmul.f32 1.0, %v1586
        %v1588 = vrcp.pop %v1247
        %v1589 = vmul.f32 1.0, %v1588
        %v1590 = vrcp.pop %v1248
        %v1591 = vmul.f32 1.0, %v1590
        %v1592 = vrcp.pop %v1249
        %v1593 = vmul.f32 1.0, %v1592
        %v1594 = vrcp.pop %v1250
        %v1595 = vmul.f32 1.0, %v1594
        %v1596 = vrcp.pop %v1251
        %v1597 = vmul.f32 1.0, %v1596
        %v1598 = vrcp.pop %v1252
        %v1599 = vmul.f32 1.0, %v1598
        %v1600 = vrcp.pop %v1253
        %v1601 = vmul.f32 1.0, %v1600
        %v1602 = vrcp.pop %v1254
        %v1603 = vmul.f32 1.0, %v1602
        %v1604 = vrcp.pop %v1255
        %v1605 = vmul.f32 1.0, %v1604
        %v1606 = vrcp.pop %v1256
        %v1607 = vmul.f32 1.0, %v1606
        %v1608 = vrcp.pop %v1257
        %v1609 = vmul.f32 1.0, %v1608
        %v1610 = vrcp.pop %v1258
        %v1611 = vmul.f32 1.0, %v1610
        %v1612 = vrcp.pop %v1259
        %v1613 = vmul.f32 1.0, %v1612
        %v1614 = vrcp.pop %v1260
        %v1615 = vmul.f32 1.0, %v1614
        %v1616 = vrcp.pop %v1261
        %v1617 = vmul.f32 1.0, %v1616
        %v1618 = vrcp.pop %v1262
        %v1619 = vmul.f32 1.0, %v1618
        %v1620 = vrcp.pop %v1263
        %v1621 = vmul.f32 1.0, %v1620
        %v1622 = vrcp.pop %v1264
        %v1623 = vmul.f32 1.0, %v1622
        %v1624 = vrcp.pop %v1265
        %v1625 = vmul.f32 1.0, %v1624
        %v1626 = vrcp.pop %v1266
        %v1627 = vmul.f32 1.0, %v1626
        %v1628 = vrcp.pop %v1267
        %v1629 = vmul.f32 1.0, %v1628
        %v1630 = vrcp.pop %v1268
        %v1631 = vmul.f32 1.0, %v1630
        %v1632 = vrcp.pop %v1269
        %v1633 = vmul.f32 1.0, %v1632
        %v1634 = vrcp.pop %v1270
        %v1635 = vmul.f32 1.0, %v1634
        %v1636 = vrcp.pop %v1271
        %v1637 = vmul.f32 1.0, %v1636
        %v1638 = vrcp.pop %v1272
        %v1639 = vmul.f32 1.0, %v1638
        %v1640 = vrcp.pop %v1273
        %v1641 = vmul.f32 1.0, %v1640
        %v1642 = vrcp.pop %v1274
        %v1643 = vmul.f32 1.0, %v1642
        %v1644 = vrcp.pop %v1275
        %v1645 = vmul.f32 1.0, %v1644
        %v1646 = vrcp.pop %v1276
        %v1647 = vmul.f32 1.0, %v1646
        %v1648 = vrcp.pop %v1277
        %v1649 = vmul.f32 1.0, %v1648
        %v1650 = vrcp.pop %v1278
        %v1651 = vmul.f32 1.0, %v1650
        %v1652 = vrcp.pop %v1279
        %v1653 = vmul.f32 1.0, %v1652
        %v1654 = vrcp.pop %v1280
        %v1655 = vmul.f32 1.0, %v1654
        %v1656 = vrcp.pop %v1281
        %v1657 = vmul.f32 1.0, %v1656
        %v1658 = vrcp.pop %v1282
        %v1659 = vmul.f32 1.0, %v1658
        %v1660 = vrcp.pop %v1283
        %v1661 = vmul.f32 1.0, %v1660
        %v1662 = vrcp.pop %v1284
        %v1663 = vmul.f32 1.0, %v1662
        %v1664 = vrcp.pop %v1285
        %v1665 = vmul.f32 1.0, %v1664
        %v1666 = vrcp.pop %v1286
        %v1667 = vmul.f32 1.0, %v1666
        %v1668 = vrcp.pop %v1287
        %v1669 = vmul.f32 1.0, %v1668
        %v1670 = vrcp.pop %v1288
        %v1671 = vmul.f32 1.0, %v1670
        %v1672 = vrcp.pop %v1289
        %v1673 = vmul.f32 1.0, %v1672
        %v1674 = vrcp.pop %v1290
        %v1675 = vmul.f32 1.0, %v1674
        %v1676 = vrcp.pop %v1291
        %v1677 = vmul.f32 1.0, %v1676
        %v1678 = vrcp.pop %v1292
        %v1679 = vmul.f32 1.0, %v1678
        %v1680 = vrcp.pop %v1293
        %v1681 = vmul.f32 1.0, %v1680
        %v1682 = vrcp.pop %v1294
        %v1683 = vmul.f32 1.0, %v1682
        %v1684 = vrcp.pop %v1295
        %v1685 = vmul.f32 1.0, %v1684
        %v1686 = vrcp.pop %v1296
        %v1687 = vmul.f32 1.0, %v1686
        %v1688 = vrcp.pop %v1297
        %v1689 = vmul.f32 1.0, %v1688
        %v1690 = vrcp.pop %v1298
        %v1691 = vmul.f32 1.0, %v1690
        %v1692 = vrcp.pop %v1299
        %v1693 = vmul.f32 1.0, %v1692
        %v1694 = vrcp.pop %v1300
        %v1695 = vmul.f32 1.0, %v1694
        %v1696 = vrcp.pop %v1301
        %v1697 = vmul.f32 1.0, %v1696
        %v1698 = vrcp.pop %v1302
        %v1699 = vmul.f32 1.0, %v1698
        %v1700 = vrcp.pop %v1303
        %v1701 = vmul.f32 1.0, %v1700
        %v1702 = vrcp.pop %v1304
        %v1703 = vmul.f32 1.0, %v1702
        %v1704 = vrcp.pop %v1305
        %v1705 = vmul.f32 1.0, %v1704
        %v1706 = vrcp.pop %v1306
        %v1707 = vmul.f32 1.0, %v1706
        %v1708 = vrcp.pop %v1307
        %v1709 = vmul.f32 1.0, %v1708
        %v1710 = vrcp.pop %v1308
        %v1711 = vmul.f32 1.0, %v1710
        %v1712 = vrcp.pop %v1309
        %v1713 = vmul.f32 1.0, %v1712
        %v1714 = vrcp.pop %v1310
        %v1715 = vmul.f32 1.0, %v1714
        %v1716 = vrcp.pop %v1311
        %v1717 = vmul.f32 1.0, %v1716
        %v1718 = vrcp.pop %v1312
        %v1719 = vmul.f32 1.0, %v1718
        %v1720 = vrcp.pop %v1313
        %v1721 = vmul.f32 1.0, %v1720
        %v1722 = vrcp.pop %v1314
        %v1723 = vmul.f32 1.0, %v1722
        %v1724 = vrcp.pop %v1315
        %v1725 = vmul.f32 1.0, %v1724
        %v1726 = vrcp.pop %v1316
        %v1727 = vmul.f32 1.0, %v1726
        %v1728 = vrcp.pop %v1317
        %v1729 = vmul.f32 1.0, %v1728
        %v1730 = vrcp.pop %v1318
        %v1731 = vmul.f32 1.0, %v1730
        %v1732 = vrcp.pop %v1319
        %v1733 = vmul.f32 1.0, %v1732
        %v1734 = vrcp.pop %v1320
        %v1735 = vmul.f32 1.0, %v1734
        %v1736 = vrcp.pop %v1321
        %v1737 = vmul.f32 1.0, %v1736
        %v1738 = vrcp.pop %v1322
        %v1739 = vmul.f32 1.0, %v1738
        %v1740 = vrcp.pop %v1323
        %v1741 = vmul.f32 1.0, %v1740
        %v1742 = vrcp.pop %v1324
        %v1743 = vmul.f32 1.0, %v1742
        %v1744 = vrcp.pop %v1325
        %v1745 = vmul.f32 1.0, %v1744
        %v1746 = vrcp.pop %v1326
        %v1747 = vmul.f32 1.0, %v1746
        %v1748 = vrcp.pop %v1327
        %v1749 = vmul.f32 1.0, %v1748
        %v1750 = vrcp.pop %v1328
        %v1751 = vmul.f32 1.0, %v1750
        %v1752 = vrcp.pop %v1329
        %v1753 = vmul.f32 1.0, %v1752
        %v1754 = vrcp.pop %v1330
        %v1755 = vmul.f32 1.0, %v1754
        %v1756 = vrcp.pop %v1331
        %v1757 = vmul.f32 1.0, %v1756
        %v1758 = vrcp.pop %v1332
        %v1759 = vmul.f32 1.0, %v1758
        %v1760 = vrcp.pop %v1333
        %v1761 = vmul.f32 1.0, %v1760
        %v1762 = vrcp.pop %v1334
        %v1763 = vmul.f32 1.0, %v1762
        %v1764 = vrcp.pop %v1335
        %v1765 = vmul.f32 1.0, %v1764
        %v1766 = vrcp.pop %v1336
        %v1767 = vmul.f32 1.0, %v1766
        %v1768 = vrcp.pop %v1337
        %v1769 = vmul.f32 1.0, %v1768
        %v1770 = vrcp.pop %v1338
        %v1771 = vmul.f32 1.0, %v1770
        %v1772 = vrcp.pop %v1339
        %v1773 = vmul.f32 1.0, %v1772
        %v1774 = vrcp.pop %v1340
        %v1775 = vmul.f32 1.0, %v1774
        %v1776 = vrcp.pop %v1341
        %v1777 = vmul.f32 1.0, %v1776
        %v1778 = vrcp.pop %v1342
        %v1779 = vmul.f32 1.0, %v1778
        %v1780 = vrcp.pop %v1343
        %v1781 = vmul.f32 1.0, %v1780
        %v1782 = vrcp.pop %v1344
        %v1783 = vmul.f32 1.0, %v1782
        %v1784 = vrcp.pop %v1345
        %v1785 = vmul.f32 1.0, %v1784
        %v1786 = vrcp.pop %v1346
        %v1787 = vmul.f32 1.0, %v1786
        %v1788 = vrcp.pop %v1347
        %v1789 = vmul.f32 1.0, %v1788
        %v1790 = vrcp.pop %v1348
        %v1791 = vmul.f32 1.0, %v1790
        %v1792 = vrcp.pop %v1349
        %v1793 = vmul.f32 1.0, %v1792
        %v1794 = vrcp.pop %v1350
        %v1795 = vmul.f32 1.0, %v1794
        %v1796 = vrcp.pop %v1351
        %v1797 = vmul.f32 1.0, %v1796
        %v1798 = vrcp.pop %v1352
        %v1799 = vmul.f32 1.0, %v1798
        %v1800 = vrcp.pop %v1353
        %v1801 = vmul.f32 1.0, %v1800
        %v1802 = vrcp.pop %v1354
        %v1803 = vmul.f32 1.0, %v1802
        %v1804 = vrcp.pop %v1355
        %v1805 = vmul.f32 1.0, %v1804
        %v1806 = vrcp.pop %v1356
        %v1807 = vmul.f32 1.0, %v1806
        %v1808 = vrcp.pop %v1357
        %v1809 = vmul.f32 1.0, %v1808
        %v1810 = vrcp.pop %v1358
        %v1811 = vmul.f32 1.0, %v1810
        %v1812 = vrcp.pop %v1359
        %v1813 = vmul.f32 1.0, %v1812
        %v1814 = vrcp.pop %v1360
        %v1815 = vmul.f32 1.0, %v1814
        %v1816 = vrcp.pop %v1361
        %v1817 = vmul.f32 1.0, %v1816
        %v1818 = vrcp.pop %v1362
        %v1819 = vmul.f32 1.0, %v1818
        %v1820 = vrcp.pop %v1363
        %v1821 = vmul.f32 1.0, %v1820
        %v1822 = vrcp.pop %v1364
        %v1823 = vmul.f32 1.0, %v1822
        %v1824 = vrcp.pop %v1365
        %v1825 = vmul.f32 1.0, %v1824
        %v1826 = vrcp.pop %v1366
        %v1827 = vmul.f32 1.0, %v1826
        %v1828 = vrcp.pop %v1367
        %v1829 = vmul.f32 1.0, %v1828
        %v1830 = vrcp.pop %v1368
        %v1831 = vmul.f32 1.0, %v1830
        %v1832 = vrcp.pop %v1369
        %v1833 = vmul.f32 1.0, %v1832
        %v1834 = vrcp.pop %v1370
        %v1835 = vmul.f32 1.0, %v1834
        %v1836 = vrcp.pop %v1371
        %v1837 = vmul.f32 1.0, %v1836
        %v1838 = vrcp.pop %v1372
        %v1839 = vmul.f32 1.0, %v1838
        %v1840 = vrcp.pop %v1373
        %v1841 = vmul.f32 1.0, %v1840
        %v1842 = vrcp.pop %v1374
        %v1843 = vmul.f32 1.0, %v1842
        %v1844 = vrcp.pop %v1375
        %v1845 = vmul.f32 1.0, %v1844
        %v1846 = vrcp.pop %v1376
        %v1847 = vmul.f32 1.0, %v1846
        %v1848 = vrcp.pop %v1377
        %v1849 = vmul.f32 1.0, %v1848
        %v1850 = vrcp.pop %v1378
        %v1851 = vmul.f32 1.0, %v1850
        %v1852 = vrcp.pop %v1379
        %v1853 = vmul.f32 1.0, %v1852
        %v1854 = vrcp.pop %v1380
        %v1855 = vmul.f32 1.0, %v1854
        %v1856 = vrcp.pop %v1381
        %v1857 = vmul.f32 1.0, %v1856
        %v1858 = vrcp.pop %v1382
        %v1859 = vmul.f32 1.0, %v1858
        %v1860 = vrcp.pop %v1383
        %v1861 = vmul.f32 1.0, %v1860
        %v1862 = vrcp.pop %v1384
        %v1863 = vmul.f32 1.0, %v1862
        %v1864 = vrcp.pop %v1385
        %v1865 = vmul.f32 1.0, %v1864
        %v1866 = vrcp.pop %v1386
        %v1867 = vmul.f32 1.0, %v1866
        %v1868 = vrcp.pop %v1387
        %v1869 = vmul.f32 1.0, %v1868
        %v1870 = vrcp.pop %v1388
        %v1871 = vmul.f32 1.0, %v1870
        %v1872 = vrcp.pop %v1389
        %v1873 = vmul.f32 1.0, %v1872
        %v1874 = vrcp.pop %v1390
        %v1875 = vmul.f32 1.0, %v1874
        %v1876 = vrcp.pop %v1391
        %v1877 = vmul.f32 1.0, %v1876
        %v1878 = vrcp.pop %v1392
        %v1879 = vmul.f32 1.0, %v1878
        %v1880 = vrcp.pop %v1393
        %v1881 = vmul.f32 1.0, %v1880
        %v1882 = vrcp.pop %v1394
        %v1883 = vmul.f32 1.0, %v1882
        %v1884 = vrcp.pop %v1395
        %v1885 = vmul.f32 1.0, %v1884
        %v1886 = vrcp.pop %v1396
        %v1887 = vmul.f32 1.0, %v1886
        %v1888 = vrcp.pop %v1397
        %v1889 = vmul.f32 1.0, %v1888
        %v1890 = vrcp.pop %v1398
        %v1891 = vmul.f32 1.0, %v1890
        %v1892 = vrcp.pop %v1399
        %v1893 = vmul.f32 1.0, %v1892
        %v1894 = vrcp.pop %v1400
        %v1895 = vmul.f32 1.0, %v1894
        %v1896 = vrcp.pop %v1401
        %v1897 = vmul.f32 1.0, %v1896
        %v1898 = vrcp.pop %v1402
        %v1899 = vmul.f32 1.0, %v1898
        %v1900 = vrcp.pop %v1403
        %v1901 = vmul.f32 1.0, %v1900
        %v1902 = vrcp.pop %v1404
        %v1903 = vmul.f32 1.0, %v1902
        %v1904 = vrcp.pop %v1405
        %v1905 = vmul.f32 1.0, %v1904
        %v1906 = vrcp.pop %v1406
        %v1907 = vmul.f32 1.0, %v1906
        %v1908 = vrcp.pop %v1407
        %v1909 = vmul.f32 1.0, %v1908
        %v1910 = vrcp.pop %v1408
        %v1911 = vmul.f32 1.0, %v1910
        %v1912 = vrcp.pop %v1409
        %v1913 = vmul.f32 1.0, %v1912
        %v1914 = vrcp.pop %v1410
        %v1915 = vmul.f32 1.0, %v1914
        %v1916 = vrcp.pop %v1411
        %v1917 = vmul.f32 1.0, %v1916
        %v1918 = vrcp.pop %v1412
        %v1919 = vmul.f32 1.0, %v1918
        %v1920 = vrcp.pop %v1413
        %v1921 = vmul.f32 1.0, %v1920
        %v1922 = vrcp.pop %v1414
        %v1923 = vmul.f32 1.0, %v1922
        %v1924 = vrcp.pop %v1415
        %v1925 = vmul.f32 1.0, %v1924
        %v1926 = vrcp.pop %v1416
        %v1927 = vmul.f32 1.0, %v1926
        %v1928 = vrcp.pop %v1417
        %v1929 = vmul.f32 1.0, %v1928
        %v1930 = vmul.f32 %v138, %v1419
        %v1931 = vmul.f32 %v139, %v1421
        %v1932 = vmul.f32 %v140, %v1423
        %v1933 = vmul.f32 %v141, %v1425
        %v1934 = vmul.f32 %v142, %v1427
        %v1935 = vmul.f32 %v143, %v1429
        %v1936 = vmul.f32 %v144, %v1431
        %v1937 = vmul.f32 %v145, %v1433
        %v1938 = vmul.f32 %v146, %v1435
        %v1939 = vmul.f32 %v147, %v1437
        %v1940 = vmul.f32 %v148, %v1439
        %v1941 = vmul.f32 %v149, %v1441
        %v1942 = vmul.f32 %v150, %v1443
        %v1943 = vmul.f32 %v151, %v1445
        %v1944 = vmul.f32 %v152, %v1447
        %v1945 = vmul.f32 %v153, %v1449
        %v1946 = vmul.f32 %v154, %v1451
        %v1947 = vmul.f32 %v155, %v1453
        %v1948 = vmul.f32 %v156, %v1455
        %v1949 = vmul.f32 %v157, %v1457
        %v1950 = vmul.f32 %v158, %v1459
        %v1951 = vmul.f32 %v159, %v1461
        %v1952 = vmul.f32 %v160, %v1463
        %v1953 = vmul.f32 %v161, %v1465
        %v1954 = vmul.f32 %v162, %v1467
        %v1955 = vmul.f32 %v163, %v1469
        %v1956 = vmul.f32 %v164, %v1471
        %v1957 = vmul.f32 %v165, %v1473
        %v1958 = vmul.f32 %v166, %v1475
        %v1959 = vmul.f32 %v167, %v1477
        %v1960 = vmul.f32 %v168, %v1479
        %v1961 = vmul.f32 %v169, %v1481
        %v1962 = vmul.f32 %v170, %v1483
        %v1963 = vmul.f32 %v171, %v1485
        %v1964 = vmul.f32 %v172, %v1487
        %v1965 = vmul.f32 %v173, %v1489
        %v1966 = vmul.f32 %v174, %v1491
        %v1967 = vmul.f32 %v175, %v1493
        %v1968 = vmul.f32 %v176, %v1495
        %v1969 = vmul.f32 %v177, %v1497
        %v1970 = vmul.f32 %v178, %v1499
        %v1971 = vmul.f32 %v179, %v1501
        %v1972 = vmul.f32 %v180, %v1503
        %v1973 = vmul.f32 %v181, %v1505
        %v1974 = vmul.f32 %v182, %v1507
        %v1975 = vmul.f32 %v183, %v1509
        %v1976 = vmul.f32 %v184, %v1511
        %v1977 = vmul.f32 %v185, %v1513
        %v1978 = vmul.f32 %v186, %v1515
        %v1979 = vmul.f32 %v187, %v1517
        %v1980 = vmul.f32 %v188, %v1519
        %v1981 = vmul.f32 %v189, %v1521
        %v1982 = vmul.f32 %v190, %v1523
        %v1983 = vmul.f32 %v191, %v1525
        %v1984 = vmul.f32 %v192, %v1527
        %v1985 = vmul.f32 %v193, %v1529
        %v1986 = vmul.f32 %v194, %v1531
        %v1987 = vmul.f32 %v195, %v1533
        %v1988 = vmul.f32 %v196, %v1535
        %v1989 = vmul.f32 %v197, %v1537
        %v1990 = vmul.f32 %v198, %v1539
        %v1991 = vmul.f32 %v199, %v1541
        %v1992 = vmul.f32 %v200, %v1543
        %v1993 = vmul.f32 %v201, %v1545
        %v1994 = vmul.f32 %v202, %v1547
        %v1995 = vmul.f32 %v203, %v1549
        %v1996 = vmul.f32 %v204, %v1551
        %v1997 = vmul.f32 %v205, %v1553
        %v1998 = vmul.f32 %v206, %v1555
        %v1999 = vmul.f32 %v207, %v1557
        %v2000 = vmul.f32 %v208, %v1559
        %v2001 = vmul.f32 %v209, %v1561
        %v2002 = vmul.f32 %v210, %v1563
        %v2003 = vmul.f32 %v211, %v1565
        %v2004 = vmul.f32 %v212, %v1567
        %v2005 = vmul.f32 %v213, %v1569
        %v2006 = vmul.f32 %v214, %v1571
        %v2007 = vmul.f32 %v215, %v1573
        %v2008 = vmul.f32 %v216, %v1575
        %v2009 = vmul.f32 %v217, %v1577
        %v2010 = vmul.f32 %v218, %v1579
        %v2011 = vmul.f32 %v219, %v1581
        %v2012 = vmul.f32 %v220, %v1583
        %v2013 = vmul.f32 %v221, %v1585
        %v2014 = vmul.f32 %v222, %v1587
        %v2015 = vmul.f32 %v223, %v1589
        %v2016 = vmul.f32 %v224, %v1591
        %v2017 = vmul.f32 %v225, %v1593
        %v2018 = vmul.f32 %v226, %v1595
        %v2019 = vmul.f32 %v227, %v1597
        %v2020 = vmul.f32 %v228, %v1599
        %v2021 = vmul.f32 %v229, %v1601
        %v2022 = vmul.f32 %v230, %v1603
        %v2023 = vmul.f32 %v231, %v1605
        %v2024 = vmul.f32 %v232, %v1607
        %v2025 = vmul.f32 %v233, %v1609
        %v2026 = vmul.f32 %v234, %v1611
        %v2027 = vmul.f32 %v235, %v1613
        %v2028 = vmul.f32 %v236, %v1615
        %v2029 = vmul.f32 %v237, %v1617
        %v2030 = vmul.f32 %v238, %v1619
        %v2031 = vmul.f32 %v239, %v1621
        %v2032 = vmul.f32 %v240, %v1623
        %v2033 = vmul.f32 %v241, %v1625
        %v2034 = vmul.f32 %v242, %v1627
        %v2035 = vmul.f32 %v243, %v1629
        %v2036 = vmul.f32 %v244, %v1631
        %v2037 = vmul.f32 %v245, %v1633
        %v2038 = vmul.f32 %v246, %v1635
        %v2039 = vmul.f32 %v247, %v1637
        %v2040 = vmul.f32 %v248, %v1639
        %v2041 = vmul.f32 %v249, %v1641
        %v2042 = vmul.f32 %v250, %v1643
        %v2043 = vmul.f32 %v251, %v1645
        %v2044 = vmul.f32 %v252, %v1647
        %v2045 = vmul.f32 %v253, %v1649
        %v2046 = vmul.f32 %v254, %v1651
        %v2047 = vmul.f32 %v255, %v1653
        %v2048 = vmul.f32 %v256, %v1655
        %v2049 = vmul.f32 %v257, %v1657
        %v2050 = vmul.f32 %v258, %v1659
        %v2051 = vmul.f32 %v259, %v1661
        %v2052 = vmul.f32 %v260, %v1663
        %v2053 = vmul.f32 %v261, %v1665
        %v2054 = vmul.f32 %v262, %v1667
        %v2055 = vmul.f32 %v263, %v1669
        %v2056 = vmul.f32 %v264, %v1671
        %v2057 = vmul.f32 %v265, %v1673
        %v2058 = vmul.f32 %v266, %v1675
        %v2059 = vmul.f32 %v267, %v1677
        %v2060 = vmul.f32 %v268, %v1679
        %v2061 = vmul.f32 %v269, %v1681
        %v2062 = vmul.f32 %v270, %v1683
        %v2063 = vmul.f32 %v271, %v1685
        %v2064 = vmul.f32 %v272, %v1687
        %v2065 = vmul.f32 %v273, %v1689
        %v2066 = vmul.f32 %v274, %v1691
        %v2067 = vmul.f32 %v275, %v1693
        %v2068 = vmul.f32 %v276, %v1695
        %v2069 = vmul.f32 %v277, %v1697
        %v2070 = vmul.f32 %v278, %v1699
        %v2071 = vmul.f32 %v279, %v1701
        %v2072 = vmul.f32 %v280, %v1703
        %v2073 = vmul.f32 %v281, %v1705
        %v2074 = vmul.f32 %v282, %v1707
        %v2075 = vmul.f32 %v283, %v1709
        %v2076 = vmul.f32 %v284, %v1711
        %v2077 = vmul.f32 %v285, %v1713
        %v2078 = vmul.f32 %v286, %v1715
        %v2079 = vmul.f32 %v287, %v1717
        %v2080 = vmul.f32 %v288, %v1719
        %v2081 = vmul.f32 %v289, %v1721
        %v2082 = vmul.f32 %v290, %v1723
        %v2083 = vmul.f32 %v291, %v1725
        %v2084 = vmul.f32 %v292, %v1727
        %v2085 = vmul.f32 %v293, %v1729
        %v2086 = vmul.f32 %v294, %v1731
        %v2087 = vmul.f32 %v295, %v1733
        %v2088 = vmul.f32 %v296, %v1735
        %v2089 = vmul.f32 %v297, %v1737
        %v2090 = vmul.f32 %v298, %v1739
        %v2091 = vmul.f32 %v299, %v1741
        %v2092 = vmul.f32 %v300, %v1743
        %v2093 = vmul.f32 %v301, %v1745
        %v2094 = vmul.f32 %v302, %v1747
        %v2095 = vmul.f32 %v303, %v1749
        %v2096 = vmul.f32 %v304, %v1751
        %v2097 = vmul.f32 %v305, %v1753
        %v2098 = vmul.f32 %v306, %v1755
        %v2099 = vmul.f32 %v307, %v1757
        %v2100 = vmul.f32 %v308, %v1759
        %v2101 = vmul.f32 %v309, %v1761
        %v2102 = vmul.f32 %v310, %v1763
        %v2103 = vmul.f32 %v311, %v1765
        %v2104 = vmul.f32 %v312, %v1767
        %v2105 = vmul.f32 %v313, %v1769
        %v2106 = vmul.f32 %v314, %v1771
        %v2107 = vmul.f32 %v315, %v1773
        %v2108 = vmul.f32 %v316, %v1775
        %v2109 = vmul.f32 %v317, %v1777
        %v2110 = vmul.f32 %v318, %v1779
        %v2111 = vmul.f32 %v319, %v1781
        %v2112 = vmul.f32 %v320, %v1783
        %v2113 = vmul.f32 %v321, %v1785
        %v2114 = vmul.f32 %v322, %v1787
        %v2115 = vmul.f32 %v323, %v1789
        %v2116 = vmul.f32 %v324, %v1791
        %v2117 = vmul.f32 %v325, %v1793
        %v2118 = vmul.f32 %v326, %v1795
        %v2119 = vmul.f32 %v327, %v1797
        %v2120 = vmul.f32 %v328, %v1799
        %v2121 = vmul.f32 %v329, %v1801
        %v2122 = vmul.f32 %v330, %v1803
        %v2123 = vmul.f32 %v331, %v1805
        %v2124 = vmul.f32 %v332, %v1807
        %v2125 = vmul.f32 %v333, %v1809
        %v2126 = vmul.f32 %v334, %v1811
        %v2127 = vmul.f32 %v335, %v1813
        %v2128 = vmul.f32 %v336, %v1815
        %v2129 = vmul.f32 %v337, %v1817
        %v2130 = vmul.f32 %v338, %v1819
        %v2131 = vmul.f32 %v339, %v1821
        %v2132 = vmul.f32 %v340, %v1823
        %v2133 = vmul.f32 %v341, %v1825
        %v2134 = vmul.f32 %v342, %v1827
        %v2135 = vmul.f32 %v343, %v1829
        %v2136 = vmul.f32 %v344, %v1831
        %v2137 = vmul.f32 %v345, %v1833
        %v2138 = vmul.f32 %v346, %v1835
        %v2139 = vmul.f32 %v347, %v1837
        %v2140 = vmul.f32 %v348, %v1839
        %v2141 = vmul.f32 %v349, %v1841
        %v2142 = vmul.f32 %v350, %v1843
        %v2143 = vmul.f32 %v351, %v1845
        %v2144 = vmul.f32 %v352, %v1847
        %v2145 = vmul.f32 %v353, %v1849
        %v2146 = vmul.f32 %v354, %v1851
        %v2147 = vmul.f32 %v355, %v1853
        %v2148 = vmul.f32 %v356, %v1855
        %v2149 = vmul.f32 %v357, %v1857
        %v2150 = vmul.f32 %v358, %v1859
        %v2151 = vmul.f32 %v359, %v1861
        %v2152 = vmul.f32 %v360, %v1863
        %v2153 = vmul.f32 %v361, %v1865
        %v2154 = vmul.f32 %v362, %v1867
        %v2155 = vmul.f32 %v363, %v1869
        %v2156 = vmul.f32 %v364, %v1871
        %v2157 = vmul.f32 %v365, %v1873
        %v2158 = vmul.f32 %v366, %v1875
        %v2159 = vmul.f32 %v367, %v1877
        %v2160 = vmul.f32 %v368, %v1879
        %v2161 = vmul.f32 %v369, %v1881
        %v2162 = vmul.f32 %v370, %v1883
        %v2163 = vmul.f32 %v371, %v1885
        %v2164 = vmul.f32 %v372, %v1887
        %v2165 = vmul.f32 %v373, %v1889
        %v2166 = vmul.f32 %v374, %v1891
        %v2167 = vmul.f32 %v375, %v1893
        %v2168 = vmul.f32 %v376, %v1895
        %v2169 = vmul.f32 %v377, %v1897
        %v2170 = vmul.f32 %v378, %v1899
        %v2171 = vmul.f32 %v379, %v1901
        %v2172 = vmul.f32 %v380, %v1903
        %v2173 = vmul.f32 %v381, %v1905
        %v2174 = vmul.f32 %v382, %v1907
        %v2175 = vmul.f32 %v383, %v1909
        %v2176 = vmul.f32 %v384, %v1911
        %v2177 = vmul.f32 %v385, %v1913
        %v2178 = vmul.f32 %v386, %v1915
        %v2179 = vmul.f32 %v387, %v1917
        %v2180 = vmul.f32 %v388, %v1919
        %v2181 = vmul.f32 %v389, %v1921
        %v2182 = vmul.f32 %v390, %v1923
        %v2183 = vmul.f32 %v391, %v1925
        %v2184 = vmul.f32 %v392, %v1927
        %v2185 = vmul.f32 %v393, %v1929
        %2186 = vst [vmem:[%s135] sm:$0xff] %v1930
        %2187 = vst [vmem:[%s135 + $0x8] sm:$0xff] %v1931
        %2188 = vst [vmem:[%s135 + $0x10] sm:$0xff] %v1932
        %2189 = vst [vmem:[%s135 + $0x18] sm:$0xff] %v1933
        %2190 = vst [vmem:[%s135 + $0x20] sm:$0xff] %v1934
        %2191 = vst [vmem:[%s135 + $0x28] sm:$0xff] %v1935
        %2192 = vst [vmem:[%s135 + $0x30] sm:$0xff] %v1936
        %2193 = vst [vmem:[%s135 + $0x38] sm:$0xff] %v1937
        %2194 = vst [vmem:[%s135 + $0x40] sm:$0xff] %v1938
        %2195 = vst [vmem:[%s135 + $0x48] sm:$0xff] %v1939
        %2196 = vst [vmem:[%s135 + $0x50] sm:$0xff] %v1940
        %2197 = vst [vmem:[%s135 + $0x58] sm:$0xff] %v1941
        %2198 = vst [vmem:[%s135 + $0x60] sm:$0xff] %v1942
        %2199 = vst [vmem:[%s135 + $0x68] sm:$0xff] %v1943
        %2200 = vst [vmem:[%s135 + $0x70] sm:$0xff] %v1944
        %2201 = vst [vmem:[%s135 + $0x78] sm:$0xff] %v1945
        %2202 = vst [vmem:[%s135 + $0x80] sm:$0xff] %v1946
        %2203 = vst [vmem:[%s135 + $0x88] sm:$0xff] %v1947
        %2204 = vst [vmem:[%s135 + $0x90] sm:$0xff] %v1948
        %2205 = vst [vmem:[%s135 + $0x98] sm:$0xff] %v1949
        %2206 = vst [vmem:[%s135 + $0xa0] sm:$0xff] %v1950
        %2207 = vst [vmem:[%s135 + $0xa8] sm:$0xff] %v1951
        %2208 = vst [vmem:[%s135 + $0xb0] sm:$0xff] %v1952
        %2209 = vst [vmem:[%s135 + $0xb8] sm:$0xff] %v1953
        %2210 = vst [vmem:[%s135 + $0xc0] sm:$0xff] %v1954
        %2211 = vst [vmem:[%s135 + $0xc8] sm:$0xff] %v1955
        %2212 = vst [vmem:[%s135 + $0xd0] sm:$0xff] %v1956
        %2213 = vst [vmem:[%s135 + $0xd8] sm:$0xff] %v1957
        %2214 = vst [vmem:[%s135 + $0xe0] sm:$0xff] %v1958
        %2215 = vst [vmem:[%s135 + $0xe8] sm:$0xff] %v1959
        %2216 = vst [vmem:[%s135 + $0xf0] sm:$0xff] %v1960
        %2217 = vst [vmem:[%s135 + $0xf8] sm:$0xff] %v1961
        %2218 = vst [vmem:[%s135 + $0x100] sm:$0xff] %v1962
        %2219 = vst [vmem:[%s135 + $0x108] sm:$0xff] %v1963
        %2220 = vst [vmem:[%s135 + $0x110] sm:$0xff] %v1964
        %2221 = vst [vmem:[%s135 + $0x118] sm:$0xff] %v1965
        %2222 = vst [vmem:[%s135 + $0x120] sm:$0xff] %v1966
        %2223 = vst [vmem:[%s135 + $0x128] sm:$0xff] %v1967
        %2224 = vst [vmem:[%s135 + $0x130] sm:$0xff] %v1968
        %2225 = vst [vmem:[%s135 + $0x138] sm:$0xff] %v1969
        %2226 = vst [vmem:[%s135 + $0x140] sm:$0xff] %v1970
        %2227 = vst [vmem:[%s135 + $0x148] sm:$0xff] %v1971
        %2228 = vst [vmem:[%s135 + $0x150] sm:$0xff] %v1972
        %2229 = vst [vmem:[%s135 + $0x158] sm:$0xff] %v1973
        %2230 = vst [vmem:[%s135 + $0x160] sm:$0xff] %v1974
        %2231 = vst [vmem:[%s135 + $0x168] sm:$0xff] %v1975
        %2232 = vst [vmem:[%s135 + $0x170] sm:$0xff] %v1976
        %2233 = vst [vmem:[%s135 + $0x178] sm:$0xff] %v1977
        %2234 = vst [vmem:[%s135 + $0x180] sm:$0xff] %v1978
        %2235 = vst [vmem:[%s135 + $0x188] sm:$0xff] %v1979
        %2236 = vst [vmem:[%s135 + $0x190] sm:$0xff] %v1980
        %2237 = vst [vmem:[%s135 + $0x198] sm:$0xff] %v1981
        %2238 = vst [vmem:[%s135 + $0x1a0] sm:$0xff] %v1982
        %2239 = vst [vmem:[%s135 + $0x1a8] sm:$0xff] %v1983
        %2240 = vst [vmem:[%s135 + $0x1b0] sm:$0xff] %v1984
        %2241 = vst [vmem:[%s135 + $0x1b8] sm:$0xff] %v1985
        %2242 = vst [vmem:[%s135 + $0x1c0] sm:$0xff] %v1986
        %2243 = vst [vmem:[%s135 + $0x1c8] sm:$0xff] %v1987
        %2244 = vst [vmem:[%s135 + $0x1d0] sm:$0xff] %v1988
        %2245 = vst [vmem:[%s135 + $0x1d8] sm:$0xff] %v1989
        %2246 = vst [vmem:[%s135 + $0x1e0] sm:$0xff] %v1990
        %2247 = vst [vmem:[%s135 + $0x1e8] sm:$0xff] %v1991
        %2248 = vst [vmem:[%s135 + $0x1f0] sm:$0xff] %v1992
        %2249 = vst [vmem:[%s135 + $0x1f8] sm:$0xff] %v1993
        %2250 = vst [vmem:[%s135 + $0x200] sm:$0xff] %v1994
        %2251 = vst [vmem:[%s135 + $0x208] sm:$0xff] %v1995
        %2252 = vst [vmem:[%s135 + $0x210] sm:$0xff] %v1996
        %2253 = vst [vmem:[%s135 + $0x218] sm:$0xff] %v1997
        %2254 = vst [vmem:[%s135 + $0x220] sm:$0xff] %v1998
        %2255 = vst [vmem:[%s135 + $0x228] sm:$0xff] %v1999
        %2256 = vst [vmem:[%s135 + $0x230] sm:$0xff] %v2000
        %2257 = vst [vmem:[%s135 + $0x238] sm:$0xff] %v2001
        %2258 = vst [vmem:[%s135 + $0x240] sm:$0xff] %v2002
        %2259 = vst [vmem:[%s135 + $0x248] sm:$0xff] %v2003
        %2260 = vst [vmem:[%s135 + $0x250] sm:$0xff] %v2004
        %2261 = vst [vmem:[%s135 + $0x258] sm:$0xff] %v2005
        %2262 = vst [vmem:[%s135 + $0x260] sm:$0xff] %v2006
        %2263 = vst [vmem:[%s135 + $0x268] sm:$0xff] %v2007
        %2264 = vst [vmem:[%s135 + $0x270] sm:$0xff] %v2008
        %2265 = vst [vmem:[%s135 + $0x278] sm:$0xff] %v2009
        %2266 = vst [vmem:[%s135 + $0x280] sm:$0xff] %v2010
        %2267 = vst [vmem:[%s135 + $0x288] sm:$0xff] %v2011
        %2268 = vst [vmem:[%s135 + $0x290] sm:$0xff] %v2012
        %2269 = vst [vmem:[%s135 + $0x298] sm:$0xff] %v2013
        %2270 = vst [vmem:[%s135 + $0x2a0] sm:$0xff] %v2014
        %2271 = vst [vmem:[%s135 + $0x2a8] sm:$0xff] %v2015
        %2272 = vst [vmem:[%s135 + $0x2b0] sm:$0xff] %v2016
        %2273 = vst [vmem:[%s135 + $0x2b8] sm:$0xff] %v2017
        %2274 = vst [vmem:[%s135 + $0x2c0] sm:$0xff] %v2018
        %2275 = vst [vmem:[%s135 + $0x2c8] sm:$0xff] %v2019
        %2276 = vst [vmem:[%s135 + $0x2d0] sm:$0xff] %v2020
        %2277 = vst [vmem:[%s135 + $0x2d8] sm:$0xff] %v2021
        %2278 = vst [vmem:[%s135 + $0x2e0] sm:$0xff] %v2022
        %2279 = vst [vmem:[%s135 + $0x2e8] sm:$0xff] %v2023
        %2280 = vst [vmem:[%s135 + $0x2f0] sm:$0xff] %v2024
        %2281 = vst [vmem:[%s135 + $0x2f8] sm:$0xff] %v2025
        %2282 = vst [vmem:[%s135 + $0x300] sm:$0xff] %v2026
        %2283 = vst [vmem:[%s135 + $0x308] sm:$0xff] %v2027
        %2284 = vst [vmem:[%s135 + $0x310] sm:$0xff] %v2028
        %2285 = vst [vmem:[%s135 + $0x318] sm:$0xff] %v2029
        %2286 = vst [vmem:[%s135 + $0x320] sm:$0xff] %v2030
        %2287 = vst [vmem:[%s135 + $0x328] sm:$0xff] %v2031
        %2288 = vst [vmem:[%s135 + $0x330] sm:$0xff] %v2032
        %2289 = vst [vmem:[%s135 + $0x338] sm:$0xff] %v2033
        %2290 = vst [vmem:[%s135 + $0x340] sm:$0xff] %v2034
        %2291 = vst [vmem:[%s135 + $0x348] sm:$0xff] %v2035
        %2292 = vst [vmem:[%s135 + $0x350] sm:$0xff] %v2036
        %2293 = vst [vmem:[%s135 + $0x358] sm:$0xff] %v2037
        %2294 = vst [vmem:[%s135 + $0x360] sm:$0xff] %v2038
        %2295 = vst [vmem:[%s135 + $0x368] sm:$0xff] %v2039
        %2296 = vst [vmem:[%s135 + $0x370] sm:$0xff] %v2040
        %2297 = vst [vmem:[%s135 + $0x378] sm:$0xff] %v2041
        %2298 = vst [vmem:[%s135 + $0x380] sm:$0xff] %v2042
        %2299 = vst [vmem:[%s135 + $0x388] sm:$0xff] %v2043
        %2300 = vst [vmem:[%s135 + $0x390] sm:$0xff] %v2044
        %2301 = vst [vmem:[%s135 + $0x398] sm:$0xff] %v2045
        %2302 = vst [vmem:[%s135 + $0x3a0] sm:$0xff] %v2046
        %2303 = vst [vmem:[%s135 + $0x3a8] sm:$0xff] %v2047
        %2304 = vst [vmem:[%s135 + $0x3b0] sm:$0xff] %v2048
        %2305 = vst [vmem:[%s135 + $0x3b8] sm:$0xff] %v2049
        %2306 = vst [vmem:[%s135 + $0x3c0] sm:$0xff] %v2050
        %2307 = vst [vmem:[%s135 + $0x3c8] sm:$0xff] %v2051
        %2308 = vst [vmem:[%s135 + $0x3d0] sm:$0xff] %v2052
        %2309 = vst [vmem:[%s135 + $0x3d8] sm:$0xff] %v2053
        %2310 = vst [vmem:[%s135 + $0x3e0] sm:$0xff] %v2054
        %2311 = vst [vmem:[%s135 + $0x3e8] sm:$0xff] %v2055
        %2312 = vst [vmem:[%s135 + $0x3f0] sm:$0xff] %v2056
        %2313 = vst [vmem:[%s135 + $0x3f8] sm:$0xff] %v2057
        %2314 = vst [vmem:[%s135 + $0x400] sm:$0xff] %v2058
        %2315 = vst [vmem:[%s135 + $0x408] sm:$0xff] %v2059
        %2316 = vst [vmem:[%s135 + $0x410] sm:$0xff] %v2060
        %2317 = vst [vmem:[%s135 + $0x418] sm:$0xff] %v2061
        %2318 = vst [vmem:[%s135 + $0x420] sm:$0xff] %v2062
        %2319 = vst [vmem:[%s135 + $0x428] sm:$0xff] %v2063
        %2320 = vst [vmem:[%s135 + $0x430] sm:$0xff] %v2064
        %2321 = vst [vmem:[%s135 + $0x438] sm:$0xff] %v2065
        %2322 = vst [vmem:[%s135 + $0x440] sm:$0xff] %v2066
        %2323 = vst [vmem:[%s135 + $0x448] sm:$0xff] %v2067
        %2324 = vst [vmem:[%s135 + $0x450] sm:$0xff] %v2068
        %2325 = vst [vmem:[%s135 + $0x458] sm:$0xff] %v2069
        %2326 = vst [vmem:[%s135 + $0x460] sm:$0xff] %v2070
        %2327 = vst [vmem:[%s135 + $0x468] sm:$0xff] %v2071
        %2328 = vst [vmem:[%s135 + $0x470] sm:$0xff] %v2072
        %2329 = vst [vmem:[%s135 + $0x478] sm:$0xff] %v2073
        %2330 = vst [vmem:[%s135 + $0x480] sm:$0xff] %v2074
        %2331 = vst [vmem:[%s135 + $0x488] sm:$0xff] %v2075
        %2332 = vst [vmem:[%s135 + $0x490] sm:$0xff] %v2076
        %2333 = vst [vmem:[%s135 + $0x498] sm:$0xff] %v2077
        %2334 = vst [vmem:[%s135 + $0x4a0] sm:$0xff] %v2078
        %2335 = vst [vmem:[%s135 + $0x4a8] sm:$0xff] %v2079
        %2336 = vst [vmem:[%s135 + $0x4b0] sm:$0xff] %v2080
        %2337 = vst [vmem:[%s135 + $0x4b8] sm:$0xff] %v2081
        %2338 = vst [vmem:[%s135 + $0x4c0] sm:$0xff] %v2082
        %2339 = vst [vmem:[%s135 + $0x4c8] sm:$0xff] %v2083
        %2340 = vst [vmem:[%s135 + $0x4d0] sm:$0xff] %v2084
        %2341 = vst [vmem:[%s135 + $0x4d8] sm:$0xff] %v2085
        %2342 = vst [vmem:[%s135 + $0x4e0] sm:$0xff] %v2086
        %2343 = vst [vmem:[%s135 + $0x4e8] sm:$0xff] %v2087
        %2344 = vst [vmem:[%s135 + $0x4f0] sm:$0xff] %v2088
        %2345 = vst [vmem:[%s135 + $0x4f8] sm:$0xff] %v2089
        %2346 = vst [vmem:[%s135 + $0x500] sm:$0xff] %v2090
        %2347 = vst [vmem:[%s135 + $0x508] sm:$0xff] %v2091
        %2348 = vst [vmem:[%s135 + $0x510] sm:$0xff] %v2092
        %2349 = vst [vmem:[%s135 + $0x518] sm:$0xff] %v2093
        %2350 = vst [vmem:[%s135 + $0x520] sm:$0xff] %v2094
        %2351 = vst [vmem:[%s135 + $0x528] sm:$0xff] %v2095
        %2352 = vst [vmem:[%s135 + $0x530] sm:$0xff] %v2096
        %2353 = vst [vmem:[%s135 + $0x538] sm:$0xff] %v2097
        %2354 = vst [vmem:[%s135 + $0x540] sm:$0xff] %v2098
        %2355 = vst [vmem:[%s135 + $0x548] sm:$0xff] %v2099
        %2356 = vst [vmem:[%s135 + $0x550] sm:$0xff] %v2100
        %2357 = vst [vmem:[%s135 + $0x558] sm:$0xff] %v2101
        %2358 = vst [vmem:[%s135 + $0x560] sm:$0xff] %v2102
        %2359 = vst [vmem:[%s135 + $0x568] sm:$0xff] %v2103
        %2360 = vst [vmem:[%s135 + $0x570] sm:$0xff] %v2104
        %2361 = vst [vmem:[%s135 + $0x578] sm:$0xff] %v2105
        %2362 = vst [vmem:[%s135 + $0x580] sm:$0xff] %v2106
        %2363 = vst [vmem:[%s135 + $0x588] sm:$0xff] %v2107
        %2364 = vst [vmem:[%s135 + $0x590] sm:$0xff] %v2108
        %2365 = vst [vmem:[%s135 + $0x598] sm:$0xff] %v2109
        %2366 = vst [vmem:[%s135 + $0x5a0] sm:$0xff] %v2110
        %2367 = vst [vmem:[%s135 + $0x5a8] sm:$0xff] %v2111
        %2368 = vst [vmem:[%s135 + $0x5b0] sm:$0xff] %v2112
        %2369 = vst [vmem:[%s135 + $0x5b8] sm:$0xff] %v2113
        %2370 = vst [vmem:[%s135 + $0x5c0] sm:$0xff] %v2114
        %2371 = vst [vmem:[%s135 + $0x5c8] sm:$0xff] %v2115
        %2372 = vst [vmem:[%s135 + $0x5d0] sm:$0xff] %v2116
        %2373 = vst [vmem:[%s135 + $0x5d8] sm:$0xff] %v2117
        %2374 = vst [vmem:[%s135 + $0x5e0] sm:$0xff] %v2118
        %2375 = vst [vmem:[%s135 + $0x5e8] sm:$0xff] %v2119
        %2376 = vst [vmem:[%s135 + $0x5f0] sm:$0xff] %v2120
        %2377 = vst [vmem:[%s135 + $0x5f8] sm:$0xff] %v2121
        %2378 = vst [vmem:[%s135 + $0x600] sm:$0xff] %v2122
        %2379 = vst [vmem:[%s135 + $0x608] sm:$0xff] %v2123
        %2380 = vst [vmem:[%s135 + $0x610] sm:$0xff] %v2124
        %2381 = vst [vmem:[%s135 + $0x618] sm:$0xff] %v2125
        %2382 = vst [vmem:[%s135 + $0x620] sm:$0xff] %v2126
        %2383 = vst [vmem:[%s135 + $0x628] sm:$0xff] %v2127
        %2384 = vst [vmem:[%s135 + $0x630] sm:$0xff] %v2128
        %2385 = vst [vmem:[%s135 + $0x638] sm:$0xff] %v2129
        %2386 = vst [vmem:[%s135 + $0x640] sm:$0xff] %v2130
        %2387 = vst [vmem:[%s135 + $0x648] sm:$0xff] %v2131
        %2388 = vst [vmem:[%s135 + $0x650] sm:$0xff] %v2132
        %2389 = vst [vmem:[%s135 + $0x658] sm:$0xff] %v2133
        %2390 = vst [vmem:[%s135 + $0x660] sm:$0xff] %v2134
        %2391 = vst [vmem:[%s135 + $0x668] sm:$0xff] %v2135
        %2392 = vst [vmem:[%s135 + $0x670] sm:$0xff] %v2136
        %2393 = vst [vmem:[%s135 + $0x678] sm:$0xff] %v2137
        %2394 = vst [vmem:[%s135 + $0x680] sm:$0xff] %v2138
        %2395 = vst [vmem:[%s135 + $0x688] sm:$0xff] %v2139
        %2396 = vst [vmem:[%s135 + $0x690] sm:$0xff] %v2140
        %2397 = vst [vmem:[%s135 + $0x698] sm:$0xff] %v2141
        %2398 = vst [vmem:[%s135 + $0x6a0] sm:$0xff] %v2142
        %2399 = vst [vmem:[%s135 + $0x6a8] sm:$0xff] %v2143
        %2400 = vst [vmem:[%s135 + $0x6b0] sm:$0xff] %v2144
        %2401 = vst [vmem:[%s135 + $0x6b8] sm:$0xff] %v2145
        %2402 = vst [vmem:[%s135 + $0x6c0] sm:$0xff] %v2146
        %2403 = vst [vmem:[%s135 + $0x6c8] sm:$0xff] %v2147
        %2404 = vst [vmem:[%s135 + $0x6d0] sm:$0xff] %v2148
        %2405 = vst [vmem:[%s135 + $0x6d8] sm:$0xff] %v2149
        %2406 = vst [vmem:[%s135 + $0x6e0] sm:$0xff] %v2150
        %2407 = vst [vmem:[%s135 + $0x6e8] sm:$0xff] %v2151
        %2408 = vst [vmem:[%s135 + $0x6f0] sm:$0xff] %v2152
        %2409 = vst [vmem:[%s135 + $0x6f8] sm:$0xff] %v2153
        %2410 = vst [vmem:[%s135 + $0x700] sm:$0xff] %v2154
        %2411 = vst [vmem:[%s135 + $0x708] sm:$0xff] %v2155
        %2412 = vst [vmem:[%s135 + $0x710] sm:$0xff] %v2156
        %2413 = vst [vmem:[%s135 + $0x718] sm:$0xff] %v2157
        %2414 = vst [vmem:[%s135 + $0x720] sm:$0xff] %v2158
        %2415 = vst [vmem:[%s135 + $0x728] sm:$0xff] %v2159
        %2416 = vst [vmem:[%s135 + $0x730] sm:$0xff] %v2160
        %2417 = vst [vmem:[%s135 + $0x738] sm:$0xff] %v2161
        %2418 = vst [vmem:[%s135 + $0x740] sm:$0xff] %v2162
        %2419 = vst [vmem:[%s135 + $0x748] sm:$0xff] %v2163
        %2420 = vst [vmem:[%s135 + $0x750] sm:$0xff] %v2164
        %2421 = vst [vmem:[%s135 + $0x758] sm:$0xff] %v2165
        %2422 = vst [vmem:[%s135 + $0x760] sm:$0xff] %v2166
        %2423 = vst [vmem:[%s135 + $0x768] sm:$0xff] %v2167
        %2424 = vst [vmem:[%s135 + $0x770] sm:$0xff] %v2168
        %2425 = vst [vmem:[%s135 + $0x778] sm:$0xff] %v2169
        %2426 = vst [vmem:[%s135 + $0x780] sm:$0xff] %v2170
        %2427 = vst [vmem:[%s135 + $0x788] sm:$0xff] %v2171
        %2428 = vst [vmem:[%s135 + $0x790] sm:$0xff] %v2172
        %2429 = vst [vmem:[%s135 + $0x798] sm:$0xff] %v2173
        %2430 = vst [vmem:[%s135 + $0x7a0] sm:$0xff] %v2174
        %2431 = vst [vmem:[%s135 + $0x7a8] sm:$0xff] %v2175
        %2432 = vst [vmem:[%s135 + $0x7b0] sm:$0xff] %v2176
        %2433 = vst [vmem:[%s135 + $0x7b8] sm:$0xff] %v2177
        %2434 = vst [vmem:[%s135 + $0x7c0] sm:$0xff] %v2178
        %2435 = vst [vmem:[%s135 + $0x7c8] sm:$0xff] %v2179
        %2436 = vst [vmem:[%s135 + $0x7d0] sm:$0xff] %v2180
        %2437 = vst [vmem:[%s135 + $0x7d8] sm:$0xff] %v2181
        %2438 = vst [vmem:[%s135 + $0x7e0] sm:$0xff] %v2182
        %2439 = vst [vmem:[%s135 + $0x7e8] sm:$0xff] %v2183
        %2440 = vst [vmem:[%s135 + $0x7f0] sm:$0xff] %v2184
        %2441 = vst [vmem:[%s135 + $0x7f8] sm:$0xff] %v2185
        %s2442 = sand.u32 %s52, 1
        %s2443 = scalar_lea.sflag [#allocation4], %s2442
        %s2444 = sand.u32 %s52, 1
        %s2445 = smul.addr %s2444, 2048
        %s2446 = scalar_lea.vmem [#allocation5], %s2445
        // Predicated region
        $region29: #{tpu_custom_call.1} parent=23 // pred_check
          %p2447 = pneg %p62
        $region30: #{tpu_custom_call.1} parent=23 // pred_check_branch
          %2449 = sbr.rel (%p2447) target = $region32
        $region31: #{tpu_custom_call.1} parent=23 // pred_region
          %s2450 = smul.u32 4, %s18
          %s2452 = ssub.s32 32768, 32768
          %2453 = vsyncadd %s2443, %s2452
          %s2454 = smul.addr %s2450, 64
          %s2455 = smul.addr %s2454, 128
          %s2456 = scalar_lea.hbm %s1, %s2455
          %s2457 = sshll.u32 %s2446, 4
          %s2458 = int_to_ptr.vmem [resolvable:$true] %s2457
          %2463 = dma.vmem_to_hbm [thread:$0]  %s2458, 32768, %s2456, %s2443, 8192, 8192, 512
        $region32: #{tpu_custom_call.1} parent=23 // pred_fallthru
          _
      $region24: #{tpu_custom_call.1} parent=5 // pred_fallthru
        _
      %p2464 = scmp.le.s32.totalorder 2, %s13
      // Predicated region
      $region33: #{tpu_custom_call.1} parent=5 // pred_check
        %p2465 = pneg %p2464
      $region34: #{tpu_custom_call.1} parent=5 // pred_check_branch
        %2467 = sbr.rel (%p2465) target = $region36
      $region35: #{tpu_custom_call.1} parent=5 // pred_region
        %s2468 = ssub.s32 %s13, 2
        // Predicated region
        $region37: #{tpu_custom_call.1} parent=35 // pred_check
          %p2469 = pneg %p68
        $region38: #{tpu_custom_call.1} parent=35 // pred_check_branch
          %2471 = sbr.rel (%p2469) target = $region40
        $region39: #{tpu_custom_call.1} parent=35 // pred_region
          %s2472 = sand.u32 %s53, 1
          %s2473 = scalar_lea.sflag [#allocation4], %s2472
          %s2474 = sand.u32 %s53, 1
          %s2475 = smul.addr %s2474, 2048
          %s2476 = scalar_lea.vmem [#allocation5], %s2475
          %2477 = dma.done %s2473, 32768
        $region40: #{tpu_custom_call.1} parent=35 // pred_fallthru
          _
      $region36: #{tpu_custom_call.1} parent=5 // pred_fallthru
        _
    $region6: #{tpu_custom_call.1} parent=1 // loop_footer
      %s17 = sadd.s32 1, %s13
    $region7: #{tpu_custom_call.1} parent=1 // loop_footer_branch
      %12 = sbr.rel target = $region3
    $region8: #{tpu_custom_call.1} parent=1 // loop_exit
      _
    %2478 = vsyncpa [#allocation3], 1
    %s2479 = scalar_lea.sflag [#allocation3], 1
    %2480 = vsyncpa %s2479, 1
    %2481 = vsyncpa [#allocation4], 1
    %s2482 = scalar_lea.sflag [#allocation4], 1
    %2483 = vsyncpa %s2482, 1

</llo_original>
